<compile_context>
chip_gen: v7x
topology: tpu7x:2x2x1
jax: 0.10.0
libtpu: 0.0.40
codegen_flags: <defaults>
</compile_context>

<pallas_src>
import jax
import jax.numpy as jnp
from jax.experimental import pallas as pl
from jax.experimental.pallas import tpu as pltpu

# ----------------------------- config ---------------------------------------
B = 2            # batch
N = 8            # sequence length
DIM = 32         # embedding dim
NUM_HEADS = 4
HEAD_DIM = DIM // NUM_HEADS
MLP_HIDDEN = int(DIM * 4.0)
LN_EPS = 1e-5
SCALE = HEAD_DIM ** -0.5
BN = B * N


# ----------------------------- kernel helpers --------------------------------
def _layernorm(v, gamma, beta):
    mu = jnp.mean(v, axis=-1, keepdims=True)
    var = jnp.mean((v - mu) ** 2, axis=-1, keepdims=True)
    return (v - mu) * jax.lax.rsqrt(var + LN_EPS) * gamma + beta


def _gelu_exact(v):
    # PyTorch nn.GELU() default = exact erf formulation.  (tanh-approx GELU
    # would route through the EUP but changes numerics vs. the reference.)
    return 0.5 * v * (1.0 + jax.lax.erf(v * (2.0 ** -0.5)))


# ----------------------------- kernel ----------------------------------------
def block_kernel(x_ref,
                 ln1_g_ref, ln1_b_ref,
                 wq_ref, bq_ref, wk_ref, bk_ref, wv_ref, bv_ref,
                 wproj_ref, bproj_ref,
                 ln2_g_ref, ln2_b_ref,
                 w1_ref, b1_ref, w2_ref, b2_ref,
                 o_ref):
    # One grid step = one batch element (N consecutive rows of the (BN, DIM) slab).
    x = x_ref[...]                                            # (N, DIM) f32

    # ---- attention branch ----------------------------------------------------
    hn = _layernorm(x, ln1_g_ref[...], ln1_b_ref[...])        # (N, DIM) f32

    # Head-batched QKV: broadcast the LN output once over the head axis and use
    # per-head weight slabs (SCALE already folded into Q in the wrapper).
    hb = jnp.broadcast_to(hn.astype(jnp.bfloat16)[None],
                          (NUM_HEADS, N, DIM))                # (H, N, DIM) bf16

    q = jnp.einsum('hnc,hcd->hnd', hb, wq_ref[...],
                   preferred_element_type=jnp.float32) + bq_ref[...]   # (H, N, hd)
    k = jnp.einsum('hnc,hcd->hnd', hb, wk_ref[...],
                   preferred_element_type=jnp.float32) + bk_ref[...]
    v = jnp.einsum('hnc,hcd->hnd', hb, wv_ref[...],
                   preferred_element_type=jnp.float32) + bv_ref[...]

    # One softmax for all heads.
    s = jnp.einsum('hnd,hmd->hnm',
                   q.astype(jnp.bfloat16), k.astype(jnp.bfloat16),
                   preferred_element_type=jnp.float32)        # (H, N, N)
    m = jnp.max(s, axis=-1, keepdims=True)
    e = jnp.exp(s - m)
    p = e / jnp.sum(e, axis=-1, keepdims=True)                # exact softmax, f32

    ctx = jnp.einsum('hnm,hmd->hnd',
                     p.astype(jnp.bfloat16), v.astype(jnp.bfloat16),
                     preferred_element_type=jnp.float32)      # (H, N, hd)

    # Head-batched output projection; head reduction is (H-1) vector adds
    # (no concatenate / transpose of ctx, no per-head matmul loop).
    proj = jnp.einsum('hnd,hdc->hnc',
                      ctx.astype(jnp.bfloat16), wproj_ref[...],
                      preferred_element_type=jnp.float32)     # (H, N, DIM)
    attn_out = bproj_ref[...]                                 # (1, DIM) f32
    for h_i in range(NUM_HEADS):                              # static: 4 adds
        attn_out = attn_out + proj[h_i]

    x = x + attn_out                                          # residual 1, f32

    # ---- MLP branch ------------------------------------------------------------
    hn = _layernorm(x, ln2_g_ref[...], ln2_b_ref[...])        # (N, DIM) f32
    h1 = jnp.dot(hn.astype(jnp.bfloat16), w1_ref[...],
                 preferred_element_type=jnp.float32) + b1_ref[...]     # (N, HID)
    h1 = _gelu_exact(h1)                                      # f32 elementwise
    h2 = jnp.dot(h1.astype(jnp.bfloat16), w2_ref[...],
                 preferred_element_type=jnp.float32) + b2_ref[...]     # (N, DIM)

    # NOTE(perf): at DIM=32 this store is lane-masked; at production DIM
    # (multiple of 128) it becomes a full-width lane-dense vst automatically.
    o_ref[...] = x + h2                                       # residual 2


# ----------------------------- parameter preparation --------------------------
def prepare_kernel_params(params):
    """One-time, free preprocessing (plain JAX, outside the kernel).

    - folds the attention scale into the Q weights/bias,
    - splits QKV / proj weights into per-head slabs for head-batched attention,
    - stores matmul weights in bf16 (MXU-native); biases / LN params stay f32.
    MUST be applied exactly once before block_forward (raw params would give
    silently wrong results: missing scale / wrong weight layout).
    """
    (ln1_g, ln1_b, wqkv, bqkv, wproj, bproj,
     ln2_g, ln2_b, w1, b1, w2, b2) = params
    assert wqkv.shape == (DIM, 3 * DIM) and bqkv.shape == (1, 3 * DIM)
    assert wproj.shape == (DIM, DIM)

    def split_heads_w(w):    # (DIM, DIM) -> (H, DIM, HEAD_DIM)
        return jnp.transpose(w.reshape(DIM, NUM_HEADS, HEAD_DIM), (1, 0, 2))

    def split_heads_b(b):    # (1, DIM) -> (H, 1, HEAD_DIM)
        return jnp.transpose(b.reshape(1, NUM_HEADS, HEAD_DIM), (1, 0, 2))

    wq = split_heads_w(wqkv[:, :DIM] * SCALE).astype(jnp.bfloat16)
    wk = split_heads_w(wqkv[:, DIM:2 * DIM]).astype(jnp.bfloat16)
    wv = split_heads_w(wqkv[:, 2 * DIM:]).astype(jnp.bfloat16)
    bq = split_heads_b(bqkv[:, :DIM] * SCALE)
    bk = split_heads_b(bqkv[:, DIM:2 * DIM])
    bv = split_heads_b(bqkv[:, 2 * DIM:])
    # rows [h*hd, (h+1)*hd) of wproj multiply head h's context
    wproj_h = wproj.reshape(NUM_HEADS, HEAD_DIM, DIM).astype(jnp.bfloat16)

    return (ln1_g, ln1_b, wq, bq, wk, bk, wv, bv, wproj_h, bproj,
            ln2_g, ln2_b,
            w1.astype(jnp.bfloat16), b1, w2.astype(jnp.bfloat16), b2)


# ----------------------------- wrapper -----------------------------------------
def _resident_spec(shape):
    """Whole-array BlockSpec with a constant index_map: the weight stays VMEM-
    resident across grid steps and is never re-DMA'd."""
    rank = len(shape)

    def idx_map(b):
        return (0,) * rank

    return pl.BlockSpec(shape, idx_map)


@jax.jit
def block_forward(x, kparams):
    (ln1_g, ln1_b, wq, bq, wk, bk, wv, bv, wproj_h, bproj,
     ln2_g, ln2_b, w1, b1, w2, b2) = kparams

    x2 = x.reshape(BN, DIM)      # (BN, DIM) slab; row-tiled by the grid below
    weights = (ln1_g, ln1_b, wq, bq, wk, bk, wv, bv, wproj_h, bproj,
               ln2_g, ln2_b, w1, b1, w2, b2)

    out = pl.pallas_call(
        block_kernel,
        out_shape=jax.ShapeDtypeStruct((BN, DIM), jnp.float32),
        grid=(B,),                                            # one step per batch elem
        in_specs=[pl.BlockSpec((N, DIM), lambda b: (b, 0))]   # row tile of x
                 + [_resident_spec(w.shape) for w in weights],
        out_specs=pl.BlockSpec((N, DIM), lambda b: (b, 0)),
        compiler_params=pltpu.CompilerParams(
            dimension_semantics=("parallel",),                # v7x: shard over 2 TCs
        ),
    )(x2, *weights)

    return out.reshape(B, N, DIM)


# ----------------------------- reference (pure JAX, f32) -----------------------
def block_reference(x, params):
    (ln1_g, ln1_b, wqkv, bqkv, wproj, bproj,
     ln2_g, ln2_b, w1, b1, w2, b2) = params

    def ln(v, g, b):
        mu = jnp.mean(v, axis=-1, keepdims=True)
        var = jnp.mean((v - mu) ** 2, axis=-1, keepdims=True)
        return (v - mu) / jnp.sqrt(var + LN_EPS) * g + b

    h = ln(x, ln1_g, ln1_b)                               # (B, N, C)
    qkv = h @ wqkv + bqkv                                 # (B, N, 3C)
    qkv = qkv.reshape(B, N, 3, NUM_HEADS, HEAD_DIM).transpose(2, 0, 3, 1, 4)
    q, k, v = qkv[0], qkv[1], qkv[2]                      # (B, H, N, hd)
    attn = (q * SCALE) @ jnp.swapaxes(k, -2, -1)
    attn = jax.nn.softmax(attn, axis=-1)
    o = attn @ v                                          # (B, H, N, hd)
    o = o.transpose(0, 2, 1, 3).reshape(B, N, DIM)
    x = x + (o @ wproj + bproj)

    h = ln(x, ln2_g, ln2_b)
    h = jax.nn.gelu(h @ w1 + b1, approximate=False)
    h = h @ w2 + b2
    return x + h


# ----------------------------- main --------------------------------------------
if __name__ == "__main__":
    key = jax.random.PRNGKey(0)
    ks = jax.random.split(key, 10)

    x = jax.random.normal(ks[0], (B, N, DIM), dtype=jnp.float32)

    # Deterministic synthetic parameters (shapes from Block.__init__).
    # Linear weights stored pre-transposed so the forward computes x @ W.
    ln1_g = jnp.ones((1, DIM), jnp.float32) + 0.01 * jax.random.normal(ks[1], (1, DIM))
    ln1_b = 0.01 * jax.random.normal(ks[2], (1, DIM))
    wqkv = 0.05 * jax.random.normal(ks[3], (DIM, 3 * DIM), jnp.float32)
    bqkv = 0.01 * jax.random.normal(ks[4], (1, 3 * DIM), jnp.float32)
    wproj = 0.05 * jax.random.normal(ks[5], (DIM, DIM), jnp.float32)
    bproj = 0.01 * jax.random.normal(ks[6], (1, DIM), jnp.float32)
    ln2_g = jnp.ones((1, DIM), jnp.float32)
    ln2_b = jnp.zeros((1, DIM), jnp.float32)
    w1 = 0.05 * jax.random.normal(ks[7], (DIM, MLP_HIDDEN), jnp.float32)
    b1 = 0.01 * jax.random.normal(ks[8], (1, MLP_HIDDEN), jnp.float32)
    w2 = 0.05 * jax.random.normal(ks[9], (MLP_HIDDEN, DIM), jnp.float32)
    b2 = jnp.zeros((1, DIM), jnp.float32)

    params = (ln1_g, ln1_b, wqkv, bqkv, wproj, bproj,
              ln2_g, ln2_b, w1, b1, w2, b2)
    kparams = prepare_kernel_params(params)   # one-time, free

    out = block_forward(x, kparams)
    out = jax.block_until_ready(out)

    ref = block_reference(x, params)
    assert out.shape == (B, N, DIM)
    # tolerance accounts for bf16 MXU operands (accumulation kept in f32)
    assert jnp.allclose(out, ref, atol=1e-2, rtol=1e-2), (
        f"max abs err {jnp.max(jnp.abs(out - ref))}")

    print("KERNEL_OK")
</pallas_src>

<mosaic_0001>
module attributes {stable_mosaic.version = 11 : i64} {
  func.func @block_kernel(%arg0: i32, %arg1: memref<8x32xf32, #tpu.memory_space<vmem>>, %arg2: memref<1x32xf32, #tpu.memory_space<vmem>>, %arg3: memref<1x32xf32, #tpu.memory_space<vmem>>, %arg4: memref<4x32x8xbf16, #tpu.memory_space<vmem>>, %arg5: memref<4x1x8xf32, #tpu.memory_space<vmem>>, %arg6: memref<4x32x8xbf16, #tpu.memory_space<vmem>>, %arg7: memref<4x1x8xf32, #tpu.memory_space<vmem>>, %arg8: memref<4x32x8xbf16, #tpu.memory_space<vmem>>, %arg9: memref<4x1x8xf32, #tpu.memory_space<vmem>>, %arg10: memref<4x8x32xbf16, #tpu.memory_space<vmem>>, %arg11: memref<1x32xf32, #tpu.memory_space<vmem>>, %arg12: memref<1x32xf32, #tpu.memory_space<vmem>>, %arg13: memref<1x32xf32, #tpu.memory_space<vmem>>, %arg14: memref<32x128xbf16, #tpu.memory_space<vmem>>, %arg15: memref<1x128xf32, #tpu.memory_space<vmem>>, %arg16: memref<128x32xbf16, #tpu.memory_space<vmem>>, %arg17: memref<1x32xf32, #tpu.memory_space<vmem>>, %arg18: memref<8x32xf32, #tpu.memory_space<vmem>>) attributes {dimension_semantics = [#tpu.dimension_semantics<parallel>], iteration_bounds = array<i64: 2>, scalar_prefetch = 0 : i64, scratch_operands = 0 : i64, tpu.core_type = #tpu.core_type<tc>, window_params = [{transform_indices = @transform_0, window_bounds = array<i64: 8, 32>}, {pipeline_mode = #tpu.pipeline_mode<synchronous>, transform_indices = @transform_1, window_bounds = array<i64: 1, 32>}, {pipeline_mode = #tpu.pipeline_mode<synchronous>, transform_indices = @transform_2, window_bounds = array<i64: 1, 32>}, {pipeline_mode = #tpu.pipeline_mode<synchronous>, transform_indices = @transform_3, window_bounds = array<i64: 4, 32, 8>}, {pipeline_mode = #tpu.pipeline_mode<synchronous>, transform_indices = @transform_4, window_bounds = array<i64: 4, 1, 8>}, {pipeline_mode = #tpu.pipeline_mode<synchronous>, transform_indices = @transform_5, window_bounds = array<i64: 4, 32, 8>}, {pipeline_mode = #tpu.pipeline_mode<synchronous>, transform_indices = @transform_6, window_bounds = array<i64: 4, 1, 8>}, {pipeline_mode = #tpu.pipeline_mode<synchronous>, transform_indices = @transform_7, window_bounds = array<i64: 4, 32, 8>}, {pipeline_mode = #tpu.pipeline_mode<synchronous>, transform_indices = @transform_8, window_bounds = array<i64: 4, 1, 8>}, {pipeline_mode = #tpu.pipeline_mode<synchronous>, transform_indices = @transform_9, window_bounds = array<i64: 4, 8, 32>}, {pipeline_mode = #tpu.pipeline_mode<synchronous>, transform_indices = @transform_10, window_bounds = array<i64: 1, 32>}, {pipeline_mode = #tpu.pipeline_mode<synchronous>, transform_indices = @transform_11, window_bounds = array<i64: 1, 32>}, {pipeline_mode = #tpu.pipeline_mode<synchronous>, transform_indices = @transform_12, window_bounds = array<i64: 1, 32>}, {pipeline_mode = #tpu.pipeline_mode<synchronous>, transform_indices = @transform_13, window_bounds = array<i64: 32, 128>}, {pipeline_mode = #tpu.pipeline_mode<synchronous>, transform_indices = @transform_14, window_bounds = array<i64: 1, 128>}, {pipeline_mode = #tpu.pipeline_mode<synchronous>, transform_indices = @transform_15, window_bounds = array<i64: 128, 32>}, {pipeline_mode = #tpu.pipeline_mode<synchronous>, transform_indices = @transform_16, window_bounds = array<i64: 1, 32>}, {transform_indices = @transform_17, window_bounds = array<i64: 8, 32>}]} {
    %c0 = arith.constant 0 : index
    %c0_0 = arith.constant 0 : index
    %0 = vector.load %arg1[%c0, %c0_0] : memref<8x32xf32, #tpu.memory_space<vmem>>, vector<8x32xf32>
    %c0_1 = arith.constant 0 : index
    %c0_2 = arith.constant 0 : index
    %1 = vector.load %arg2[%c0_1, %c0_2] : memref<1x32xf32, #tpu.memory_space<vmem>>, vector<1x32xf32>
    %c0_3 = arith.constant 0 : index
    %c0_4 = arith.constant 0 : index
    %2 = vector.load %arg3[%c0_3, %c0_4] : memref<1x32xf32, #tpu.memory_space<vmem>>, vector<1x32xf32>
    %cst = arith.constant dense<0.000000e+00> : vector<8xf32>
    %3 = vector.multi_reduction <add>, %0, %cst [1] : vector<8x32xf32> to vector<8xf32>
    %4 = vector.shape_cast %3 : vector<8xf32> to vector<8x1xf32>
    %cst_5 = arith.constant 3.200000e+01 : f32
    %5 = vector.broadcast %cst_5 : f32 to vector<8x1xf32>
    %6 = arith.divf %4, %5 : vector<8x1xf32>
    %7 = vector.broadcast %6 : vector<8x1xf32> to vector<8x32xf32>
    %8 = arith.subf %0, %7 : vector<8x32xf32>
    %9 = arith.mulf %8, %8 : vector<8x32xf32>
    %cst_6 = arith.constant dense<0.000000e+00> : vector<8xf32>
    %10 = vector.multi_reduction <add>, %9, %cst_6 [1] : vector<8x32xf32> to vector<8xf32>
    %11 = vector.shape_cast %10 : vector<8xf32> to vector<8x1xf32>
    %cst_7 = arith.constant 3.200000e+01 : f32
    %12 = vector.broadcast %cst_7 : f32 to vector<8x1xf32>
    %13 = arith.divf %11, %12 : vector<8x1xf32>
    %14 = vector.broadcast %6 : vector<8x1xf32> to vector<8x32xf32>
    %15 = arith.subf %0, %14 : vector<8x32xf32>
    %cst_8 = arith.constant 9.99999974E-6 : f32
    %16 = vector.broadcast %cst_8 : f32 to vector<8x1xf32>
    %17 = arith.addf %13, %16 : vector<8x1xf32>
    %18 = math.rsqrt %17 : vector<8x1xf32>
    %19 = vector.broadcast %18 : vector<8x1xf32> to vector<8x32xf32>
    %20 = arith.mulf %15, %19 : vector<8x32xf32>
    %21 = vector.broadcast %1 : vector<1x32xf32> to vector<8x32xf32>
    %22 = arith.mulf %20, %21 : vector<8x32xf32>
    %23 = vector.broadcast %2 : vector<1x32xf32> to vector<8x32xf32>
    %24 = arith.addf %22, %23 : vector<8x32xf32>
    %25 = arith.truncf %24 : vector<8x32xf32> to vector<8x32xbf16>
    %26 = vector.shape_cast %25 : vector<8x32xbf16> to vector<1x8x32xbf16>
    %27 = vector.shape_cast %26 : vector<1x8x32xbf16> to vector<1x8x32xbf16>
    %28 = vector.broadcast %27 : vector<1x8x32xbf16> to vector<4x8x32xbf16>
    %c0_9 = arith.constant 0 : index
    %c0_10 = arith.constant 0 : index
    %c0_11 = arith.constant 0 : index
    %29 = vector.load %arg4[%c0_9, %c0_10, %c0_11] : memref<4x32x8xbf16, #tpu.memory_space<vmem>>, vector<4x32x8xbf16>
    "tpu.trace_start"() <{level = 10 : i32, message = "hnc,hcd->hnd"}> : () -> ()
    %cst_12 = arith.constant dense<0.000000e+00> : vector<4x8x8xf32>
    %30 = tpu.matmul %28, %29, %cst_12 {dimension_numbers = #tpu.dot_dimension_numbers<[2], [1], [1], [2], [0, 0, 0, 1, 1, 2], [0], [0]>} : vector<4x8x32xbf16>, vector<4x32x8xbf16>, vector<4x8x8xf32> -> vector<4x8x8xf32>
    "tpu.trace_stop"() : () -> ()
    %c0_13 = arith.constant 0 : index
    %c0_14 = arith.constant 0 : index
    %c0_15 = arith.constant 0 : index
    %31 = vector.load %arg5[%c0_13, %c0_14, %c0_15] : memref<4x1x8xf32, #tpu.memory_space<vmem>>, vector<4x1x8xf32>
    %32 = vector.broadcast %31 : vector<4x1x8xf32> to vector<4x8x8xf32>
    %33 = arith.addf %30, %32 : vector<4x8x8xf32>
    %c0_16 = arith.constant 0 : index
    %c0_17 = arith.constant 0 : index
    %c0_18 = arith.constant 0 : index
    %34 = vector.load %arg6[%c0_16, %c0_17, %c0_18] : memref<4x32x8xbf16, #tpu.memory_space<vmem>>, vector<4x32x8xbf16>
    "tpu.trace_start"() <{level = 10 : i32, message = "hnc,hcd->hnd"}> : () -> ()
    %cst_19 = arith.constant dense<0.000000e+00> : vector<4x8x8xf32>
    %35 = tpu.matmul %28, %34, %cst_19 {dimension_numbers = #tpu.dot_dimension_numbers<[2], [1], [1], [2], [0, 0, 0, 1, 1, 2], [0], [0]>} : vector<4x8x32xbf16>, vector<4x32x8xbf16>, vector<4x8x8xf32> -> vector<4x8x8xf32>
    "tpu.trace_stop"() : () -> ()
    %c0_20 = arith.constant 0 : index
    %c0_21 = arith.constant 0 : index
    %c0_22 = arith.constant 0 : index
    %36 = vector.load %arg7[%c0_20, %c0_21, %c0_22] : memref<4x1x8xf32, #tpu.memory_space<vmem>>, vector<4x1x8xf32>
    %37 = vector.broadcast %36 : vector<4x1x8xf32> to vector<4x8x8xf32>
    %38 = arith.addf %35, %37 : vector<4x8x8xf32>
    %c0_23 = arith.constant 0 : index
    %c0_24 = arith.constant 0 : index
    %c0_25 = arith.constant 0 : index
    %39 = vector.load %arg8[%c0_23, %c0_24, %c0_25] : memref<4x32x8xbf16, #tpu.memory_space<vmem>>, vector<4x32x8xbf16>
    "tpu.trace_start"() <{level = 10 : i32, message = "hnc,hcd->hnd"}> : () -> ()
    %cst_26 = arith.constant dense<0.000000e+00> : vector<4x8x8xf32>
    %40 = tpu.matmul %28, %39, %cst_26 {dimension_numbers = #tpu.dot_dimension_numbers<[2], [1], [1], [2], [0, 0, 0, 1, 1, 2], [0], [0]>} : vector<4x8x32xbf16>, vector<4x32x8xbf16>, vector<4x8x8xf32> -> vector<4x8x8xf32>
    "tpu.trace_stop"() : () -> ()
    %c0_27 = arith.constant 0 : index
    %c0_28 = arith.constant 0 : index
    %c0_29 = arith.constant 0 : index
    %41 = vector.load %arg9[%c0_27, %c0_28, %c0_29] : memref<4x1x8xf32, #tpu.memory_space<vmem>>, vector<4x1x8xf32>
    %42 = vector.broadcast %41 : vector<4x1x8xf32> to vector<4x8x8xf32>
    %43 = arith.addf %40, %42 : vector<4x8x8xf32>
    %44 = arith.truncf %33 : vector<4x8x8xf32> to vector<4x8x8xbf16>
    %45 = arith.truncf %38 : vector<4x8x8xf32> to vector<4x8x8xbf16>
    "tpu.trace_start"() <{level = 10 : i32, message = "hnd,hmd->hnm"}> : () -> ()
    %cst_30 = arith.constant dense<0.000000e+00> : vector<4x8x8xf32>
    %46 = tpu.matmul %44, %45, %cst_30 {dimension_numbers = #tpu.dot_dimension_numbers<[2], [2], [1], [1], [0, 0, 0, 1, 1, 1], [0], [0]>} : vector<4x8x8xbf16>, vector<4x8x8xbf16>, vector<4x8x8xf32> -> vector<4x8x8xf32>
    "tpu.trace_stop"() : () -> ()
    %cst_31 = arith.constant dense<0xFF800000> : vector<4x8xf32>
    %47 = vector.multi_reduction <maximumf>, %46, %cst_31 [2] : vector<4x8x8xf32> to vector<4x8xf32>
    %48 = vector.shape_cast %47 : vector<4x8xf32> to vector<4x8x1xf32>
    %49 = vector.broadcast %48 : vector<4x8x1xf32> to vector<4x8x8xf32>
    %50 = arith.subf %46, %49 : vector<4x8x8xf32>
    %51 = math.exp %50 : vector<4x8x8xf32>
    %cst_32 = arith.constant dense<0.000000e+00> : vector<4x8xf32>
    %52 = vector.multi_reduction <add>, %51, %cst_32 [2] : vector<4x8x8xf32> to vector<4x8xf32>
    %53 = vector.shape_cast %52 : vector<4x8xf32> to vector<4x8x1xf32>
    %54 = vector.broadcast %53 : vector<4x8x1xf32> to vector<4x8x8xf32>
    %55 = arith.divf %51, %54 : vector<4x8x8xf32>
    %56 = arith.truncf %55 : vector<4x8x8xf32> to vector<4x8x8xbf16>
    %57 = arith.truncf %43 : vector<4x8x8xf32> to vector<4x8x8xbf16>
    "tpu.trace_start"() <{level = 10 : i32, message = "hnm,hmd->hnd"}> : () -> ()
    %cst_33 = arith.constant dense<0.000000e+00> : vector<4x8x8xf32>
    %58 = tpu.matmul %56, %57, %cst_33 {dimension_numbers = #tpu.dot_dimension_numbers<[2], [1], [1], [2], [0, 0, 0, 1, 1, 2], [0], [0]>} : vector<4x8x8xbf16>, vector<4x8x8xbf16>, vector<4x8x8xf32> -> vector<4x8x8xf32>
    "tpu.trace_stop"() : () -> ()
    %59 = arith.truncf %58 : vector<4x8x8xf32> to vector<4x8x8xbf16>
    %c0_34 = arith.constant 0 : index
    %c0_35 = arith.constant 0 : index
    %c0_36 = arith.constant 0 : index
    %60 = vector.load %arg10[%c0_34, %c0_35, %c0_36] : memref<4x8x32xbf16, #tpu.memory_space<vmem>>, vector<4x8x32xbf16>
    "tpu.trace_start"() <{level = 10 : i32, message = "hnd,hdc->hnc"}> : () -> ()
    %cst_37 = arith.constant dense<0.000000e+00> : vector<4x8x32xf32>
    %61 = tpu.matmul %59, %60, %cst_37 {dimension_numbers = #tpu.dot_dimension_numbers<[2], [1], [1], [2], [0, 0, 0, 1, 1, 2], [0], [0]>} : vector<4x8x8xbf16>, vector<4x8x32xbf16>, vector<4x8x32xf32> -> vector<4x8x32xf32>
    "tpu.trace_stop"() : () -> ()
    %c0_38 = arith.constant 0 : index
    %c0_39 = arith.constant 0 : index
    %62 = vector.load %arg11[%c0_38, %c0_39] : memref<1x32xf32, #tpu.memory_space<vmem>>, vector<1x32xf32>
    %63 = vector.extract_strided_slice %61 {offsets = [0, 0, 0], sizes = [1, 8, 32], strides = [1, 1, 1]} : vector<4x8x32xf32> to vector<1x8x32xf32>
    %64 = vector.shape_cast %63 : vector<1x8x32xf32> to vector<8x32xf32>
    %65 = vector.broadcast %62 : vector<1x32xf32> to vector<8x32xf32>
    %66 = arith.addf %65, %64 : vector<8x32xf32>
    %67 = vector.extract_strided_slice %61 {offsets = [1, 0, 0], sizes = [1, 8, 32], strides = [1, 1, 1]} : vector<4x8x32xf32> to vector<1x8x32xf32>
    %68 = vector.shape_cast %67 : vector<1x8x32xf32> to vector<8x32xf32>
    %69 = arith.addf %66, %68 : vector<8x32xf32>
    %70 = vector.extract_strided_slice %61 {offsets = [2, 0, 0], sizes = [1, 8, 32], strides = [1, 1, 1]} : vector<4x8x32xf32> to vector<1x8x32xf32>
    %71 = vector.shape_cast %70 : vector<1x8x32xf32> to vector<8x32xf32>
    %72 = arith.addf %69, %71 : vector<8x32xf32>
    %73 = vector.extract_strided_slice %61 {offsets = [3, 0, 0], sizes = [1, 8, 32], strides = [1, 1, 1]} : vector<4x8x32xf32> to vector<1x8x32xf32>
    %74 = vector.shape_cast %73 : vector<1x8x32xf32> to vector<8x32xf32>
    %75 = arith.addf %72, %74 : vector<8x32xf32>
    %76 = arith.addf %0, %75 : vector<8x32xf32>
    %c0_40 = arith.constant 0 : index
    %c0_41 = arith.constant 0 : index
    %77 = vector.load %arg12[%c0_40, %c0_41] : memref<1x32xf32, #tpu.memory_space<vmem>>, vector<1x32xf32>
    %c0_42 = arith.constant 0 : index
    %c0_43 = arith.constant 0 : index
    %78 = vector.load %arg13[%c0_42, %c0_43] : memref<1x32xf32, #tpu.memory_space<vmem>>, vector<1x32xf32>
    %cst_44 = arith.constant dense<0.000000e+00> : vector<8xf32>
    %79 = vector.multi_reduction <add>, %76, %cst_44 [1] : vector<8x32xf32> to vector<8xf32>
    %80 = vector.shape_cast %79 : vector<8xf32> to vector<8x1xf32>
    %cst_45 = arith.constant 3.200000e+01 : f32
    %81 = vector.broadcast %cst_45 : f32 to vector<8x1xf32>
    %82 = arith.divf %80, %81 : vector<8x1xf32>
    %83 = vector.broadcast %82 : vector<8x1xf32> to vector<8x32xf32>
    %84 = arith.subf %76, %83 : vector<8x32xf32>
    %85 = arith.mulf %84, %84 : vector<8x32xf32>
    %cst_46 = arith.constant dense<0.000000e+00> : vector<8xf32>
    %86 = vector.multi_reduction <add>, %85, %cst_46 [1] : vector<8x32xf32> to vector<8xf32>
    %87 = vector.shape_cast %86 : vector<8xf32> to vector<8x1xf32>
    %cst_47 = arith.constant 3.200000e+01 : f32
    %88 = vector.broadcast %cst_47 : f32 to vector<8x1xf32>
    %89 = arith.divf %87, %88 : vector<8x1xf32>
    %90 = vector.broadcast %82 : vector<8x1xf32> to vector<8x32xf32>
    %91 = arith.subf %76, %90 : vector<8x32xf32>
    %cst_48 = arith.constant 9.99999974E-6 : f32
    %92 = vector.broadcast %cst_48 : f32 to vector<8x1xf32>
    %93 = arith.addf %89, %92 : vector<8x1xf32>
    %94 = math.rsqrt %93 : vector<8x1xf32>
    %95 = vector.broadcast %94 : vector<8x1xf32> to vector<8x32xf32>
    %96 = arith.mulf %91, %95 : vector<8x32xf32>
    %97 = vector.broadcast %77 : vector<1x32xf32> to vector<8x32xf32>
    %98 = arith.mulf %96, %97 : vector<8x32xf32>
    %99 = vector.broadcast %78 : vector<1x32xf32> to vector<8x32xf32>
    %100 = arith.addf %98, %99 : vector<8x32xf32>
    %101 = arith.truncf %100 : vector<8x32xf32> to vector<8x32xbf16>
    %c0_49 = arith.constant 0 : index
    %c0_50 = arith.constant 0 : index
    %102 = vector.load %arg14[%c0_49, %c0_50] : memref<32x128xbf16, #tpu.memory_space<vmem>>, vector<32x128xbf16>
    %cst_51 = arith.constant dense<0.000000e+00> : vector<8x128xf32>
    %103 = tpu.matmul %101, %102, %cst_51 {dimension_numbers = #tpu.dot_dimension_numbers<[1], [0], [0], [1], [0, 0, 1, 1], [], []>} : vector<8x32xbf16>, vector<32x128xbf16>, vector<8x128xf32> -> vector<8x128xf32>
    %c0_52 = arith.constant 0 : index
    %c0_53 = arith.constant 0 : index
    %104 = vector.load %arg15[%c0_52, %c0_53] : memref<1x128xf32, #tpu.memory_space<vmem>>, vector<1x128xf32>
    %105 = vector.broadcast %104 : vector<1x128xf32> to vector<8x128xf32>
    %106 = arith.addf %103, %105 : vector<8x128xf32>
    %cst_54 = arith.constant 5.000000e-01 : f32
    %107 = vector.broadcast %cst_54 : f32 to vector<8x128xf32>
    %108 = arith.mulf %107, %106 : vector<8x128xf32>
    %cst_55 = arith.constant 0.707106769 : f32
    %109 = vector.broadcast %cst_55 : f32 to vector<8x128xf32>
    %110 = arith.mulf %106, %109 : vector<8x128xf32>
    %111 = math.erf %110 : vector<8x128xf32>
    %cst_56 = arith.constant 1.000000e+00 : f32
    %112 = vector.broadcast %cst_56 : f32 to vector<8x128xf32>
    %113 = arith.addf %112, %111 : vector<8x128xf32>
    %114 = arith.mulf %108, %113 : vector<8x128xf32>
    %115 = arith.truncf %114 : vector<8x128xf32> to vector<8x128xbf16>
    %c0_57 = arith.constant 0 : index
    %c0_58 = arith.constant 0 : index
    %116 = vector.load %arg16[%c0_57, %c0_58] : memref<128x32xbf16, #tpu.memory_space<vmem>>, vector<128x32xbf16>
    %cst_59 = arith.constant dense<0.000000e+00> : vector<8x32xf32>
    %117 = tpu.matmul %115, %116, %cst_59 {dimension_numbers = #tpu.dot_dimension_numbers<[1], [0], [0], [1], [0, 0, 1, 1], [], []>} : vector<8x128xbf16>, vector<128x32xbf16>, vector<8x32xf32> -> vector<8x32xf32>
    %c0_60 = arith.constant 0 : index
    %c0_61 = arith.constant 0 : index
    %118 = vector.load %arg17[%c0_60, %c0_61] : memref<1x32xf32, #tpu.memory_space<vmem>>, vector<1x32xf32>
    %119 = vector.broadcast %118 : vector<1x32xf32> to vector<8x32xf32>
    %120 = arith.addf %117, %119 : vector<8x32xf32>
    %121 = arith.addf %76, %120 : vector<8x32xf32>
    %c0_62 = arith.constant 0 : index
    %c0_63 = arith.constant 0 : index
    %122 = vector.load %arg18[%c0_62, %c0_63] : memref<8x32xf32, #tpu.memory_space<vmem>>, vector<8x32xf32>
    tpu.vector_store %arg18[%c0_62, %c0_63], %121 {strides = array<i32>} : memref<8x32xf32, #tpu.memory_space<vmem>>, vector<8x32xf32>,
    return
  }
  func.func @transform_0(%arg0: i32) -> (i32, i32) {
    %c0_i32 = arith.constant 0 : i32
    %c0_i32_0 = arith.constant 0 : i32
    return %arg0, %c0_i32 : i32, i32
  }
  func.func @transform_1(%arg0: i32) -> (i32, i32) {
    %c0_i32 = arith.constant 0 : i32
    %c0_i32_0 = arith.constant 0 : i32
    %c0_i32_1 = arith.constant 0 : i32
    return %c0_i32, %c0_i32_0 : i32, i32
  }
  func.func @transform_2(%arg0: i32) -> (i32, i32) {
    %c0_i32 = arith.constant 0 : i32
    %c0_i32_0 = arith.constant 0 : i32
    %c0_i32_1 = arith.constant 0 : i32
    return %c0_i32, %c0_i32_0 : i32, i32
  }
  func.func @transform_3(%arg0: i32) -> (i32, i32, i32) {
    %c0_i32 = arith.constant 0 : i32
    %c0_i32_0 = arith.constant 0 : i32
    %c0_i32_1 = arith.constant 0 : i32
    %c0_i32_2 = arith.constant 0 : i32
    return %c0_i32, %c0_i32_0, %c0_i32_1 : i32, i32, i32
  }
  func.func @transform_4(%arg0: i32) -> (i32, i32, i32) {
    %c0_i32 = arith.constant 0 : i32
    %c0_i32_0 = arith.constant 0 : i32
    %c0_i32_1 = arith.constant 0 : i32
    %c0_i32_2 = arith.constant 0 : i32
    return %c0_i32, %c0_i32_0, %c0_i32_1 : i32, i32, i32
  }
  func.func @transform_5(%arg0: i32) -> (i32, i32, i32) {
    %c0_i32 = arith.constant 0 : i32
    %c0_i32_0 = arith.constant 0 : i32
    %c0_i32_1 = arith.constant 0 : i32
    %c0_i32_2 = arith.constant 0 : i32
    return %c0_i32, %c0_i32_0, %c0_i32_1 : i32, i32, i32
  }
  func.func @transform_6(%arg0: i32) -> (i32, i32, i32) {
    %c0_i32 = arith.constant 0 : i32
    %c0_i32_0 = arith.constant 0 : i32
    %c0_i32_1 = arith.constant 0 : i32
    %c0_i32_2 = arith.constant 0 : i32
    return %c0_i32, %c0_i32_0, %c0_i32_1 : i32, i32, i32
  }
  func.func @transform_7(%arg0: i32) -> (i32, i32, i32) {
    %c0_i32 = arith.constant 0 : i32
    %c0_i32_0 = arith.constant 0 : i32
    %c0_i32_1 = arith.constant 0 : i32
    %c0_i32_2 = arith.constant 0 : i32
    return %c0_i32, %c0_i32_0, %c0_i32_1 : i32, i32, i32
  }
  func.func @transform_8(%arg0: i32) -> (i32, i32, i32) {
    %c0_i32 = arith.constant 0 : i32
    %c0_i32_0 = arith.constant 0 : i32
    %c0_i32_1 = arith.constant 0 : i32
    %c0_i32_2 = arith.constant 0 : i32
    return %c0_i32, %c0_i32_0, %c0_i32_1 : i32, i32, i32
  }
  func.func @transform_9(%arg0: i32) -> (i32, i32, i32) {
    %c0_i32 = arith.constant 0 : i32
    %c0_i32_0 = arith.constant 0 : i32
    %c0_i32_1 = arith.constant 0 : i32
    %c0_i32_2 = arith.constant 0 : i32
    return %c0_i32, %c0_i32_0, %c0_i32_1 : i32, i32, i32
  }
  func.func @transform_10(%arg0: i32) -> (i32, i32) {
    %c0_i32 = arith.constant 0 : i32
    %c0_i32_0 = arith.constant 0 : i32
    %c0_i32_1 = arith.constant 0 : i32
    return %c0_i32, %c0_i32_0 : i32, i32
  }
  func.func @transform_11(%arg0: i32) -> (i32, i32) {
    %c0_i32 = arith.constant 0 : i32
    %c0_i32_0 = arith.constant 0 : i32
    %c0_i32_1 = arith.constant 0 : i32
    return %c0_i32, %c0_i32_0 : i32, i32
  }
  func.func @transform_12(%arg0: i32) -> (i32, i32) {
    %c0_i32 = arith.constant 0 : i32
    %c0_i32_0 = arith.constant 0 : i32
    %c0_i32_1 = arith.constant 0 : i32
    return %c0_i32, %c0_i32_0 : i32, i32
  }
  func.func @transform_13(%arg0: i32) -> (i32, i32) {
    %c0_i32 = arith.constant 0 : i32
    %c0_i32_0 = arith.constant 0 : i32
    %c0_i32_1 = arith.constant 0 : i32
    return %c0_i32, %c0_i32_0 : i32, i32
  }
  func.func @transform_14(%arg0: i32) -> (i32, i32) {
    %c0_i32 = arith.constant 0 : i32
    %c0_i32_0 = arith.constant 0 : i32
    %c0_i32_1 = arith.constant 0 : i32
    return %c0_i32, %c0_i32_0 : i32, i32
  }
  func.func @transform_15(%arg0: i32) -> (i32, i32) {
    %c0_i32 = arith.constant 0 : i32
    %c0_i32_0 = arith.constant 0 : i32
    %c0_i32_1 = arith.constant 0 : i32
    return %c0_i32, %c0_i32_0 : i32, i32
  }
  func.func @transform_16(%arg0: i32) -> (i32, i32) {
    %c0_i32 = arith.constant 0 : i32
    %c0_i32_0 = arith.constant 0 : i32
    %c0_i32_1 = arith.constant 0 : i32
    return %c0_i32, %c0_i32_0 : i32, i32
  }
  func.func @transform_17(%arg0: i32) -> (i32, i32) {
    %c0_i32 = arith.constant 0 : i32
    %c0_i32_0 = arith.constant 0 : i32
    return %arg0, %c0_i32 : i32, i32
  }
}

</mosaic_0001>

<llo_original>
// kernel: block_forward.1
$region0: #{block_forward.1}
  #allocation0 [shape = 'u32[]', space=smem, size = 0x4, offset = 0x4, fixed_abs, tag = 'smem constant byte address 0x4 - core index']
  #allocation1 [shape = 'u32[144,128]{1,0:T(1,128)}', space=vmem, size = 0x12000, scoped, tag = 'internal scratch']
  %s0 = inlined_call_operand.vmem [shape: f32[16,32], index: 0, kind: input, shape index: {}]
  %s1 = inlined_call_operand.vmem [shape: f32[1,32], index: 1, kind: input, shape index: {}]
  %s2 = inlined_call_operand.vmem [shape: f32[1,32], index: 2, kind: input, shape index: {}]
  %s3 = inlined_call_operand.vmem [shape: bf16[4,32,8], index: 3, kind: input, shape index: {}]
  %s4 = inlined_call_operand.vmem [shape: f32[4,1,8], index: 4, kind: input, shape index: {}]
  %s5 = inlined_call_operand.vmem [shape: bf16[4,32,8], index: 5, kind: input, shape index: {}]
  %s6 = inlined_call_operand.vmem [shape: f32[4,1,8], index: 6, kind: input, shape index: {}]
  %s7 = inlined_call_operand.vmem [shape: bf16[4,32,8], index: 7, kind: input, shape index: {}]
  %s8 = inlined_call_operand.vmem [shape: f32[4,1,8], index: 8, kind: input, shape index: {}]
  %s9 = inlined_call_operand.vmem [shape: bf16[4,8,32], index: 9, kind: input, shape index: {}]
  %s10 = inlined_call_operand.vmem [shape: f32[1,32], index: 10, kind: input, shape index: {}]
  %s11 = inlined_call_operand.vmem [shape: f32[1,32], index: 11, kind: input, shape index: {}]
  %s12 = inlined_call_operand.vmem [shape: f32[1,32], index: 12, kind: input, shape index: {}]
  %s13 = inlined_call_operand.vmem [shape: bf16[32,128], index: 13, kind: input, shape index: {}]
  %s14 = inlined_call_operand.vmem [shape: f32[1,128], index: 14, kind: input, shape index: {}]
  %s15 = inlined_call_operand.vmem [shape: bf16[128,32], index: 15, kind: input, shape index: {}]
  %s16 = inlined_call_operand.vmem [shape: f32[1,32], index: 16, kind: input, shape index: {}]
  %s17 = inlined_call_operand.hbm [shape: f32[16,32], index: 17, kind: output, shape index: {}]
  %s18 = sld [smem:[#allocation0]]
  $region101: #{block_forward.1} parent=0
    _
  %s20 = ssub.s32 1, %s18
  %s21 = scalar_select 0, %s20, %s18
  $region1: #{block_forward.1} parent=0
    #allocation2 [shape = 'u8[8192]{0}', space=vmem, size = 0x2000, scoped, tag = 'output window, operand 0']
    #allocation3 [shape = 's32[2]{0}', space=sflag, size = 0x8, scoped, tag = 'scoped memory for block_forward.1']
    %22 = vsyncpa [#allocation3], 0
    %s23 = scalar_lea.sflag [#allocation3], 1
    %24 = vsyncpa %s23, 0
    loop: start=0, step=1, limit=4
    $region2: #{block_forward.1} parent=1 // loop_pre_header
      _
    $region3: #{block_forward.1} parent=1 // loop_header
      %s26 = sphi 0, %s30
      %p27 = scmp.ge.s32.totalorder %s26, 4
      %s36 = sphi 0, %s38
      %s39 = sphi 0, %s36
      %s40 = sphi 0, %s39
      %s56 = sphi 0, %s40
      %s60 = sphi 0, %s60
      %s62 = sphi 0, %s60
      %s63 = sphi 0, %s62
      %s77 = sphi 0, %s63
      %s81 = sphi 0, %s81
      %s83 = sphi 0, %s81
      %s84 = sphi 0, %s83
      %s98 = sphi 0, %s84
      %s102 = sphi 0, %s102
      %s104 = sphi 0, %s102
      %s105 = sphi 0, %s104
      %s119 = sphi 0, %s105
      %s123 = sphi 0, %s123
      %s125 = sphi 0, %s123
      %s126 = sphi 0, %s125
      %s140 = sphi 0, %s126
      %s144 = sphi 0, %s144
      %s146 = sphi 0, %s144
      %s147 = sphi 0, %s146
      %s161 = sphi 0, %s147
      %s165 = sphi 0, %s165
      %s167 = sphi 0, %s165
      %s168 = sphi 0, %s167
      %s182 = sphi 0, %s168
      %s186 = sphi 0, %s186
      %s188 = sphi 0, %s186
      %s189 = sphi 0, %s188
      %s203 = sphi 0, %s189
      %s207 = sphi 0, %s207
      %s209 = sphi 0, %s207
      %s210 = sphi 0, %s209
      %s224 = sphi 0, %s210
      %s228 = sphi 0, %s228
      %s230 = sphi 0, %s228
      %s231 = sphi 0, %s230
      %s245 = sphi 0, %s231
      %s249 = sphi 0, %s249
      %s251 = sphi 0, %s249
      %s252 = sphi 0, %s251
      %s266 = sphi 0, %s252
      %s270 = sphi 0, %s270
      %s272 = sphi 0, %s270
      %s273 = sphi 0, %s272
      %s287 = sphi 0, %s273
      %s291 = sphi 0, %s291
      %s293 = sphi 0, %s291
      %s294 = sphi 0, %s293
      %s308 = sphi 0, %s294
      %s312 = sphi 0, %s312
      %s314 = sphi 0, %s312
      %s315 = sphi 0, %s314
      %s329 = sphi 0, %s315
      %s333 = sphi 0, %s333
      %s335 = sphi 0, %s333
      %s336 = sphi 0, %s335
      %s350 = sphi 0, %s336
      %s354 = sphi 0, %s354
      %s356 = sphi 0, %s354
      %s357 = sphi 0, %s356
      %s371 = sphi 0, %s357
      %s375 = sphi 0, %s375
      %s377 = sphi 0, %s375
      %s378 = sphi 0, %s377
      %s392 = sphi 0, %s378
      %s398 = sphi 0, %s400
      %s401 = sphi 0, %s398
      %s402 = sphi 0, %s401
      %s418 = sphi 0, %s402
    $region4: #{block_forward.1} parent=1 // loop_header_branch
      %29 = sbr.rel (%p27) target = $region8
    $region5: #{block_forward.1} parent=1 // loop_body
      %s31 = ssub.s32 %s26, 1
      %s32 = ssub.s32 %s26, 2
      %s33 = sadd.s32 %s26, 1
      %s34 = ssub.s32 %s26, %s33
      %p35 = scmp.eq.s32.totalorder %s34, 0
      %s37 = sadd.s32 %s36, 1
      %s38 = scalar_select %p35, %s36, %s37
      %p41 = pneg %p35
      %p42 = scmp.eq.s32.totalorder %s26, 1
      %p43 = por %p41, %p42
      %p44 = scmp.ne.s32.totalorder %s36, %s39
      %p45 = scmp.eq.s32.totalorder %s26, 0
      %p46 = por %p44, %p45
      %p47 = scmp.ne.s32.totalorder %s36, %s39
      %p48 = scmp.eq.s32.totalorder %s31, 1
      %p49 = por %p47, %p48
      %p50 = scmp.ne.s32.totalorder %s39, %s40
      %p51 = scmp.eq.s32.totalorder %s31, 0
      %p52 = por %p50, %p51
      %p53 = scmp.ne.s32.totalorder %s39, %s40
      %p54 = scmp.eq.s32.totalorder %s32, 1
      %p55 = por %p53, %p54
      %p57 = scmp.ne.s32.totalorder %s40, %s56
      %p58 = scmp.eq.s32.totalorder %s32, 0
      %p59 = por %p57, %p58
      %s61 = sadd.s32 %s60, 1
      %p64 = scmp.eq.s32.totalorder %s26, 1
      %p65 = scmp.ne.s32.totalorder %s60, %s62
      %p66 = scmp.eq.s32.totalorder %s26, 0
      %p67 = por %p65, %p66
      %p68 = scmp.ne.s32.totalorder %s60, %s62
      %p69 = scmp.eq.s32.totalorder %s31, 1
      %p70 = por %p68, %p69
      %p71 = scmp.ne.s32.totalorder %s62, %s63
      %p72 = scmp.eq.s32.totalorder %s31, 0
      %p73 = por %p71, %p72
      %p74 = scmp.ne.s32.totalorder %s62, %s63
      %p75 = scmp.eq.s32.totalorder %s32, 1
      %p76 = por %p74, %p75
      %p78 = scmp.ne.s32.totalorder %s63, %s77
      %p79 = scmp.eq.s32.totalorder %s32, 0
      %p80 = por %p78, %p79
      %s82 = sadd.s32 %s81, 1
      %p85 = scmp.eq.s32.totalorder %s26, 1
      %p86 = scmp.ne.s32.totalorder %s81, %s83
      %p87 = scmp.eq.s32.totalorder %s26, 0
      %p88 = por %p86, %p87
      %p89 = scmp.ne.s32.totalorder %s81, %s83
      %p90 = scmp.eq.s32.totalorder %s31, 1
      %p91 = por %p89, %p90
      %p92 = scmp.ne.s32.totalorder %s83, %s84
      %p93 = scmp.eq.s32.totalorder %s31, 0
      %p94 = por %p92, %p93
      %p95 = scmp.ne.s32.totalorder %s83, %s84
      %p96 = scmp.eq.s32.totalorder %s32, 1
      %p97 = por %p95, %p96
      %p99 = scmp.ne.s32.totalorder %s84, %s98
      %p100 = scmp.eq.s32.totalorder %s32, 0
      %p101 = por %p99, %p100
      %s103 = sadd.s32 %s102, 1
      %p106 = scmp.eq.s32.totalorder %s26, 1
      %p107 = scmp.ne.s32.totalorder %s102, %s104
      %p108 = scmp.eq.s32.totalorder %s26, 0
      %p109 = por %p107, %p108
      %p110 = scmp.ne.s32.totalorder %s102, %s104
      %p111 = scmp.eq.s32.totalorder %s31, 1
      %p112 = por %p110, %p111
      %p113 = scmp.ne.s32.totalorder %s104, %s105
      %p114 = scmp.eq.s32.totalorder %s31, 0
      %p115 = por %p113, %p114
      %p116 = scmp.ne.s32.totalorder %s104, %s105
      %p117 = scmp.eq.s32.totalorder %s32, 1
      %p118 = por %p116, %p117
      %p120 = scmp.ne.s32.totalorder %s105, %s119
      %p121 = scmp.eq.s32.totalorder %s32, 0
      %p122 = por %p120, %p121
      %s124 = sadd.s32 %s123, 1
      %p127 = scmp.eq.s32.totalorder %s26, 1
      %p128 = scmp.ne.s32.totalorder %s123, %s125
      %p129 = scmp.eq.s32.totalorder %s26, 0
      %p130 = por %p128, %p129
      %p131 = scmp.ne.s32.totalorder %s123, %s125
      %p132 = scmp.eq.s32.totalorder %s31, 1
      %p133 = por %p131, %p132
      %p134 = scmp.ne.s32.totalorder %s125, %s126
      %p135 = scmp.eq.s32.totalorder %s31, 0
      %p136 = por %p134, %p135
      %p137 = scmp.ne.s32.totalorder %s125, %s126
      %p138 = scmp.eq.s32.totalorder %s32, 1
      %p139 = por %p137, %p138
      %p141 = scmp.ne.s32.totalorder %s126, %s140
      %p142 = scmp.eq.s32.totalorder %s32, 0
      %p143 = por %p141, %p142
      %s145 = sadd.s32 %s144, 1
      %p148 = scmp.eq.s32.totalorder %s26, 1
      %p149 = scmp.ne.s32.totalorder %s144, %s146
      %p150 = scmp.eq.s32.totalorder %s26, 0
      %p151 = por %p149, %p150
      %p152 = scmp.ne.s32.totalorder %s144, %s146
      %p153 = scmp.eq.s32.totalorder %s31, 1
      %p154 = por %p152, %p153
      %p155 = scmp.ne.s32.totalorder %s146, %s147
      %p156 = scmp.eq.s32.totalorder %s31, 0
      %p157 = por %p155, %p156
      %p158 = scmp.ne.s32.totalorder %s146, %s147
      %p159 = scmp.eq.s32.totalorder %s32, 1
      %p160 = por %p158, %p159
      %p162 = scmp.ne.s32.totalorder %s147, %s161
      %p163 = scmp.eq.s32.totalorder %s32, 0
      %p164 = por %p162, %p163
      %s166 = sadd.s32 %s165, 1
      %p169 = scmp.eq.s32.totalorder %s26, 1
      %p170 = scmp.ne.s32.totalorder %s165, %s167
      %p171 = scmp.eq.s32.totalorder %s26, 0
      %p172 = por %p170, %p171
      %p173 = scmp.ne.s32.totalorder %s165, %s167
      %p174 = scmp.eq.s32.totalorder %s31, 1
      %p175 = por %p173, %p174
      %p176 = scmp.ne.s32.totalorder %s167, %s168
      %p177 = scmp.eq.s32.totalorder %s31, 0
      %p178 = por %p176, %p177
      %p179 = scmp.ne.s32.totalorder %s167, %s168
      %p180 = scmp.eq.s32.totalorder %s32, 1
      %p181 = por %p179, %p180
      %p183 = scmp.ne.s32.totalorder %s168, %s182
      %p184 = scmp.eq.s32.totalorder %s32, 0
      %p185 = por %p183, %p184
      %s187 = sadd.s32 %s186, 1
      %p190 = scmp.eq.s32.totalorder %s26, 1
      %p191 = scmp.ne.s32.totalorder %s186, %s188
      %p192 = scmp.eq.s32.totalorder %s26, 0
      %p193 = por %p191, %p192
      %p194 = scmp.ne.s32.totalorder %s186, %s188
      %p195 = scmp.eq.s32.totalorder %s31, 1
      %p196 = por %p194, %p195
      %p197 = scmp.ne.s32.totalorder %s188, %s189
      %p198 = scmp.eq.s32.totalorder %s31, 0
      %p199 = por %p197, %p198
      %p200 = scmp.ne.s32.totalorder %s188, %s189
      %p201 = scmp.eq.s32.totalorder %s32, 1
      %p202 = por %p200, %p201
      %p204 = scmp.ne.s32.totalorder %s189, %s203
      %p205 = scmp.eq.s32.totalorder %s32, 0
      %p206 = por %p204, %p205
      %s208 = sadd.s32 %s207, 1
      %p211 = scmp.eq.s32.totalorder %s26, 1
      %p212 = scmp.ne.s32.totalorder %s207, %s209
      %p213 = scmp.eq.s32.totalorder %s26, 0
      %p214 = por %p212, %p213
      %p215 = scmp.ne.s32.totalorder %s207, %s209
      %p216 = scmp.eq.s32.totalorder %s31, 1
      %p217 = por %p215, %p216
      %p218 = scmp.ne.s32.totalorder %s209, %s210
      %p219 = scmp.eq.s32.totalorder %s31, 0
      %p220 = por %p218, %p219
      %p221 = scmp.ne.s32.totalorder %s209, %s210
      %p222 = scmp.eq.s32.totalorder %s32, 1
      %p223 = por %p221, %p222
      %p225 = scmp.ne.s32.totalorder %s210, %s224
      %p226 = scmp.eq.s32.totalorder %s32, 0
      %p227 = por %p225, %p226
      %s229 = sadd.s32 %s228, 1
      %p232 = scmp.eq.s32.totalorder %s26, 1
      %p233 = scmp.ne.s32.totalorder %s228, %s230
      %p234 = scmp.eq.s32.totalorder %s26, 0
      %p235 = por %p233, %p234
      %p236 = scmp.ne.s32.totalorder %s228, %s230
      %p237 = scmp.eq.s32.totalorder %s31, 1
      %p238 = por %p236, %p237
      %p239 = scmp.ne.s32.totalorder %s230, %s231
      %p240 = scmp.eq.s32.totalorder %s31, 0
      %p241 = por %p239, %p240
      %p242 = scmp.ne.s32.totalorder %s230, %s231
      %p243 = scmp.eq.s32.totalorder %s32, 1
      %p244 = por %p242, %p243
      %p246 = scmp.ne.s32.totalorder %s231, %s245
      %p247 = scmp.eq.s32.totalorder %s32, 0
      %p248 = por %p246, %p247
      %s250 = sadd.s32 %s249, 1
      %p253 = scmp.eq.s32.totalorder %s26, 1
      %p254 = scmp.ne.s32.totalorder %s249, %s251
      %p255 = scmp.eq.s32.totalorder %s26, 0
      %p256 = por %p254, %p255
      %p257 = scmp.ne.s32.totalorder %s249, %s251
      %p258 = scmp.eq.s32.totalorder %s31, 1
      %p259 = por %p257, %p258
      %p260 = scmp.ne.s32.totalorder %s251, %s252
      %p261 = scmp.eq.s32.totalorder %s31, 0
      %p262 = por %p260, %p261
      %p263 = scmp.ne.s32.totalorder %s251, %s252
      %p264 = scmp.eq.s32.totalorder %s32, 1
      %p265 = por %p263, %p264
      %p267 = scmp.ne.s32.totalorder %s252, %s266
      %p268 = scmp.eq.s32.totalorder %s32, 0
      %p269 = por %p267, %p268
      %s271 = sadd.s32 %s270, 1
      %p274 = scmp.eq.s32.totalorder %s26, 1
      %p275 = scmp.ne.s32.totalorder %s270, %s272
      %p276 = scmp.eq.s32.totalorder %s26, 0
      %p277 = por %p275, %p276
      %p278 = scmp.ne.s32.totalorder %s270, %s272
      %p279 = scmp.eq.s32.totalorder %s31, 1
      %p280 = por %p278, %p279
      %p281 = scmp.ne.s32.totalorder %s272, %s273
      %p282 = scmp.eq.s32.totalorder %s31, 0
      %p283 = por %p281, %p282
      %p284 = scmp.ne.s32.totalorder %s272, %s273
      %p285 = scmp.eq.s32.totalorder %s32, 1
      %p286 = por %p284, %p285
      %p288 = scmp.ne.s32.totalorder %s273, %s287
      %p289 = scmp.eq.s32.totalorder %s32, 0
      %p290 = por %p288, %p289
      %s292 = sadd.s32 %s291, 1
      %p295 = scmp.eq.s32.totalorder %s26, 1
      %p296 = scmp.ne.s32.totalorder %s291, %s293
      %p297 = scmp.eq.s32.totalorder %s26, 0
      %p298 = por %p296, %p297
      %p299 = scmp.ne.s32.totalorder %s291, %s293
      %p300 = scmp.eq.s32.totalorder %s31, 1
      %p301 = por %p299, %p300
      %p302 = scmp.ne.s32.totalorder %s293, %s294
      %p303 = scmp.eq.s32.totalorder %s31, 0
      %p304 = por %p302, %p303
      %p305 = scmp.ne.s32.totalorder %s293, %s294
      %p306 = scmp.eq.s32.totalorder %s32, 1
      %p307 = por %p305, %p306
      %p309 = scmp.ne.s32.totalorder %s294, %s308
      %p310 = scmp.eq.s32.totalorder %s32, 0
      %p311 = por %p309, %p310
      %s313 = sadd.s32 %s312, 1
      %p316 = scmp.eq.s32.totalorder %s26, 1
      %p317 = scmp.ne.s32.totalorder %s312, %s314
      %p318 = scmp.eq.s32.totalorder %s26, 0
      %p319 = por %p317, %p318
      %p320 = scmp.ne.s32.totalorder %s312, %s314
      %p321 = scmp.eq.s32.totalorder %s31, 1
      %p322 = por %p320, %p321
      %p323 = scmp.ne.s32.totalorder %s314, %s315
      %p324 = scmp.eq.s32.totalorder %s31, 0
      %p325 = por %p323, %p324
      %p326 = scmp.ne.s32.totalorder %s314, %s315
      %p327 = scmp.eq.s32.totalorder %s32, 1
      %p328 = por %p326, %p327
      %p330 = scmp.ne.s32.totalorder %s315, %s329
      %p331 = scmp.eq.s32.totalorder %s32, 0
      %p332 = por %p330, %p331
      %s334 = sadd.s32 %s333, 1
      %p337 = scmp.eq.s32.totalorder %s26, 1
      %p338 = scmp.ne.s32.totalorder %s333, %s335
      %p339 = scmp.eq.s32.totalorder %s26, 0
      %p340 = por %p338, %p339
      %p341 = scmp.ne.s32.totalorder %s333, %s335
      %p342 = scmp.eq.s32.totalorder %s31, 1
      %p343 = por %p341, %p342
      %p344 = scmp.ne.s32.totalorder %s335, %s336
      %p345 = scmp.eq.s32.totalorder %s31, 0
      %p346 = por %p344, %p345
      %p347 = scmp.ne.s32.totalorder %s335, %s336
      %p348 = scmp.eq.s32.totalorder %s32, 1
      %p349 = por %p347, %p348
      %p351 = scmp.ne.s32.totalorder %s336, %s350
      %p352 = scmp.eq.s32.totalorder %s32, 0
      %p353 = por %p351, %p352
      %s355 = sadd.s32 %s354, 1
      %p358 = scmp.eq.s32.totalorder %s26, 1
      %p359 = scmp.ne.s32.totalorder %s354, %s356
      %p360 = scmp.eq.s32.totalorder %s26, 0
      %p361 = por %p359, %p360
      %p362 = scmp.ne.s32.totalorder %s354, %s356
      %p363 = scmp.eq.s32.totalorder %s31, 1
      %p364 = por %p362, %p363
      %p365 = scmp.ne.s32.totalorder %s356, %s357
      %p366 = scmp.eq.s32.totalorder %s31, 0
      %p367 = por %p365, %p366
      %p368 = scmp.ne.s32.totalorder %s356, %s357
      %p369 = scmp.eq.s32.totalorder %s32, 1
      %p370 = por %p368, %p369
      %p372 = scmp.ne.s32.totalorder %s357, %s371
      %p373 = scmp.eq.s32.totalorder %s32, 0
      %p374 = por %p372, %p373
      %s376 = sadd.s32 %s375, 1
      %p379 = scmp.eq.s32.totalorder %s26, 1
      %p380 = scmp.ne.s32.totalorder %s375, %s377
      %p381 = scmp.eq.s32.totalorder %s26, 0
      %p382 = por %p380, %p381
      %p383 = scmp.ne.s32.totalorder %s375, %s377
      %p384 = scmp.eq.s32.totalorder %s31, 1
      %p385 = por %p383, %p384
      %p386 = scmp.ne.s32.totalorder %s377, %s378
      %p387 = scmp.eq.s32.totalorder %s31, 0
      %p388 = por %p386, %p387
      %p389 = scmp.ne.s32.totalorder %s377, %s378
      %p390 = scmp.eq.s32.totalorder %s32, 1
      %p391 = por %p389, %p390
      %p393 = scmp.ne.s32.totalorder %s378, %s392
      %p394 = scmp.eq.s32.totalorder %s32, 0
      %p395 = por %p393, %p394
      %s396 = ssub.s32 %s26, %s33
      %p397 = scmp.eq.s32.totalorder %s396, 0
      %s399 = sadd.s32 %s398, 1
      %s400 = scalar_select %p397, %s398, %s399
      %p403 = pneg %p397
      %p404 = scmp.eq.s32.totalorder %s26, 1
      %p405 = por %p403, %p404
      %p406 = scmp.ne.s32.totalorder %s398, %s401
      %p407 = scmp.eq.s32.totalorder %s26, 0
      %p408 = por %p406, %p407
      %p409 = scmp.ne.s32.totalorder %s398, %s401
      %p410 = scmp.eq.s32.totalorder %s31, 1
      %p411 = por %p409, %p410
      %p412 = scmp.ne.s32.totalorder %s401, %s402
      %p413 = scmp.eq.s32.totalorder %s31, 0
      %p414 = por %p412, %p413
      %p415 = scmp.ne.s32.totalorder %s401, %s402
      %p416 = scmp.eq.s32.totalorder %s32, 1
      %p417 = por %p415, %p416
      %p419 = scmp.ne.s32.totalorder %s402, %s418
      %p420 = scmp.eq.s32.totalorder %s32, 0
      %p421 = por %p419, %p420
      %p422 = scmp.le.s32.totalorder 1, %s26
      %p423 = scmp.lt.s32.totalorder %s26, 3
      %p424 = pnand %p422, %p423
      %p425 = pneg %p424
      // Predicated region
      $region9: #{block_forward.1} parent=5 // pred_check
        _
      $region10: #{block_forward.1} parent=5 // pred_check_branch
        %427 = sbr.rel (%p424) target = $region12
      $region11: #{block_forward.1} parent=5 // pred_region
        %s428 = ssub.s32 %s26, 1
        // Predicated region
        $region13: #{block_forward.1} parent=11 // pred_check
          %p429 = pneg %p73
        $region14: #{block_forward.1} parent=11 // pred_check_branch
          %431 = sbr.rel (%p429) target = $region16
        $region15: #{block_forward.1} parent=11 // pred_region
          _
        $region16: #{block_forward.1} parent=11 // pred_fallthru
          _
        // Predicated region
        $region17: #{block_forward.1} parent=11 // pred_check
          %p432 = pneg %p94
        $region18: #{block_forward.1} parent=11 // pred_check_branch
          %434 = sbr.rel (%p432) target = $region20
        $region19: #{block_forward.1} parent=11 // pred_region
          _
        $region20: #{block_forward.1} parent=11 // pred_fallthru
          _
        // Predicated region
        $region21: #{block_forward.1} parent=11 // pred_check
          %p435 = pneg %p115
        $region22: #{block_forward.1} parent=11 // pred_check_branch
          %437 = sbr.rel (%p435) target = $region24
        $region23: #{block_forward.1} parent=11 // pred_region
          _
        $region24: #{block_forward.1} parent=11 // pred_fallthru
          _
        // Predicated region
        $region25: #{block_forward.1} parent=11 // pred_check
          %p438 = pneg %p136
        $region26: #{block_forward.1} parent=11 // pred_check_branch
          %440 = sbr.rel (%p438) target = $region28
        $region27: #{block_forward.1} parent=11 // pred_region
          _
        $region28: #{block_forward.1} parent=11 // pred_fallthru
          _
        // Predicated region
        $region29: #{block_forward.1} parent=11 // pred_check
          %p441 = pneg %p157
        $region30: #{block_forward.1} parent=11 // pred_check_branch
          %443 = sbr.rel (%p441) target = $region32
        $region31: #{block_forward.1} parent=11 // pred_region
          _
        $region32: #{block_forward.1} parent=11 // pred_fallthru
          _
        // Predicated region
        $region33: #{block_forward.1} parent=11 // pred_check
          %p444 = pneg %p178
        $region34: #{block_forward.1} parent=11 // pred_check_branch
          %446 = sbr.rel (%p444) target = $region36
        $region35: #{block_forward.1} parent=11 // pred_region
          _
        $region36: #{block_forward.1} parent=11 // pred_fallthru
          _
        // Predicated region
        $region37: #{block_forward.1} parent=11 // pred_check
          %p447 = pneg %p199
        $region38: #{block_forward.1} parent=11 // pred_check_branch
          %449 = sbr.rel (%p447) target = $region40
        $region39: #{block_forward.1} parent=11 // pred_region
          _
        $region40: #{block_forward.1} parent=11 // pred_fallthru
          _
        // Predicated region
        $region41: #{block_forward.1} parent=11 // pred_check
          %p450 = pneg %p220
        $region42: #{block_forward.1} parent=11 // pred_check_branch
          %452 = sbr.rel (%p450) target = $region44
        $region43: #{block_forward.1} parent=11 // pred_region
          _
        $region44: #{block_forward.1} parent=11 // pred_fallthru
          _
        // Predicated region
        $region45: #{block_forward.1} parent=11 // pred_check
          %p453 = pneg %p241
        $region46: #{block_forward.1} parent=11 // pred_check_branch
          %455 = sbr.rel (%p453) target = $region48
        $region47: #{block_forward.1} parent=11 // pred_region
          _
        $region48: #{block_forward.1} parent=11 // pred_fallthru
          _
        // Predicated region
        $region49: #{block_forward.1} parent=11 // pred_check
          %p456 = pneg %p262
        $region50: #{block_forward.1} parent=11 // pred_check_branch
          %458 = sbr.rel (%p456) target = $region52
        $region51: #{block_forward.1} parent=11 // pred_region
          _
        $region52: #{block_forward.1} parent=11 // pred_fallthru
          _
        // Predicated region
        $region53: #{block_forward.1} parent=11 // pred_check
          %p459 = pneg %p283
        $region54: #{block_forward.1} parent=11 // pred_check_branch
          %461 = sbr.rel (%p459) target = $region56
        $region55: #{block_forward.1} parent=11 // pred_region
          _
        $region56: #{block_forward.1} parent=11 // pred_fallthru
          _
        // Predicated region
        $region57: #{block_forward.1} parent=11 // pred_check
          %p462 = pneg %p304
        $region58: #{block_forward.1} parent=11 // pred_check_branch
          %464 = sbr.rel (%p462) target = $region60
        $region59: #{block_forward.1} parent=11 // pred_region
          _
        $region60: #{block_forward.1} parent=11 // pred_fallthru
          _
        // Predicated region
        $region61: #{block_forward.1} parent=11 // pred_check
          %p465 = pneg %p325
        $region62: #{block_forward.1} parent=11 // pred_check_branch
          %467 = sbr.rel (%p465) target = $region64
        $region63: #{block_forward.1} parent=11 // pred_region
          _
        $region64: #{block_forward.1} parent=11 // pred_fallthru
          _
        // Predicated region
        $region65: #{block_forward.1} parent=11 // pred_check
          %p468 = pneg %p346
        $region66: #{block_forward.1} parent=11 // pred_check_branch
          %470 = sbr.rel (%p468) target = $region68
        $region67: #{block_forward.1} parent=11 // pred_region
          _
        $region68: #{block_forward.1} parent=11 // pred_fallthru
          _
        // Predicated region
        $region69: #{block_forward.1} parent=11 // pred_check
          %p471 = pneg %p367
        $region70: #{block_forward.1} parent=11 // pred_check_branch
          %473 = sbr.rel (%p471) target = $region72
        $region71: #{block_forward.1} parent=11 // pred_region
          _
        $region72: #{block_forward.1} parent=11 // pred_fallthru
          _
        // Predicated region
        $region73: #{block_forward.1} parent=11 // pred_check
          %p474 = pneg %p388
        $region74: #{block_forward.1} parent=11 // pred_check_branch
          %476 = sbr.rel (%p474) target = $region76
        $region75: #{block_forward.1} parent=11 // pred_region
          _
        $region76: #{block_forward.1} parent=11 // pred_fallthru
          _
      $region12: #{block_forward.1} parent=5 // pred_fallthru
        _
      %p477 = scmp.lt.s32.totalorder %s26, 2
      // Predicated region
      $region77: #{block_forward.1} parent=5 // pred_check
        %p478 = pneg %p477
      $region78: #{block_forward.1} parent=5 // pred_check_branch
        %480 = sbr.rel (%p478) target = $region80
      $region79: #{block_forward.1} parent=5 // pred_region
        // Predicated region
        $region81: #{block_forward.1} parent=79 // pred_check
          %p481 = pneg %p46
        $region82: #{block_forward.1} parent=79 // pred_check_branch
          %483 = sbr.rel (%p481) target = $region84
        $region83: #{block_forward.1} parent=79 // pred_region
          %p484 = scmp.lt.s32.totalorder %s26, 1
          %s485 = scalar_select %p484, %s26, 1
          %s486 = smul.addr %s485, 8
          %s487 = scalar_lea.vmem %s0, %s486
        $region84: #{block_forward.1} parent=79 // pred_fallthru
          _
      $region80: #{block_forward.1} parent=5 // pred_fallthru
        _
      %p488 = scmp.le.s32.totalorder 1, %s26
      %p489 = scmp.lt.s32.totalorder %s26, 3
      %p490 = pnand %p488, %p489
      %p491 = pneg %p490
      // Predicated region
      $region85: #{block_forward.1} parent=5 // pred_check
        _
      $region86: #{block_forward.1} parent=5 // pred_check_branch
        %493 = sbr.rel (%p490) target = $region88
      $region87: #{block_forward.1} parent=5 // pred_region
        %s494 = ssub.s32 %s26, 1
        %p495 = scmp.lt.s32.totalorder %s31, 1
        %s496 = scalar_select %p495, %s31, 1
        %s497 = smul.addr %s496, 8
        %s498 = scalar_lea.vmem %s0, %s497
        %p499 = pneg %p52
        %p500 = pneg %p49
        %p501 = pneg %p73
        %p502 = pneg %p70
        %p503 = pneg %p94
        %p504 = pneg %p91
        %p505 = pneg %p115
        %p506 = pneg %p112
        %p507 = pneg %p136
        %p508 = pneg %p133
        %p509 = pneg %p157
        %p510 = pneg %p154
        %p511 = pneg %p178
        %p512 = pneg %p175
        %p513 = pneg %p199
        %p514 = pneg %p196
        %p515 = pneg %p220
        %p516 = pneg %p217
        %p517 = pneg %p241
        %p518 = pneg %p238
        %p519 = pneg %p262
        %p520 = pneg %p259
        %p521 = pneg %p283
        %p522 = pneg %p280
        %p523 = pneg %p304
        %p524 = pneg %p301
        %p525 = pneg %p325
        %p526 = pneg %p322
        %p527 = pneg %p346
        %p528 = pneg %p343
        %p529 = pneg %p367
        %p530 = pneg %p364
        %p531 = pneg %p388
        %p532 = pneg %p385
        %p533 = pneg %p414
        %p534 = pneg %p411
        %s535 = sand.u32 %s401, 1
        %s536 = scalar_lea.sflag [#allocation3], %s535
        %s537 = sand.u32 %s401, 1
        %s538 = smul.addr %s537, 8
        %s539 = scalar_lea.vmem [#allocation2], %s538
        %p540 = scmp.lt.s32.totalorder %s31, 1
        %s541 = scalar_select %p540, %s31, 1
        %s542 = smul.addr %s541, 8
        %s543 = scalar_lea.vmem %s0, %s542
        %v545 = vld [vmem:[%s543] sm:$0xff]
        %v546 = vld [vmem:[%s1] sm:$0x1]
        %v547 = vld [vmem:[%s2] sm:$0x1]
        %vm548 = vcmask 261120
        %v549 = vsel %vm548, %v545, 0.0
        %550 = vadd.xlane.f32.xlu0 %v549
        %v551 = vpop.xlane.xlu0 %550
        %v552 = vrcp.pop 32.0
        %v553 = vmul.f32 %v551, %v552
        %v554 = vsub.f32 %v545, %v553
        %v555 = vmul.f32 %v554, %v554
        %v556 = vsel %vm548, %v555, 0.0
        %557 = vadd.xlane.f32.xlu0 %v556
        %v558 = vpop.xlane.xlu0 %557
        %v559 = vmul.f32 %v558, %v552
        %v560 = vadd.f32 %v559, 1e-05
        %v561 = vrsqrt.pop %v560
        %v562 = vmul.f32 %v554, %v561
        %v564 = vlaneseq
        %v565 = vshrl.u32 %v564, 7
        %v566 = vsub.s32 0, %v565
        %v567 = vrot.slane %v546, %v566
        %v569 = vmul.f32 %v562, %v567
        %v571 = vlaneseq
        %v572 = vshrl.u32 %v571, 7
        %v573 = vsub.s32 0, %v572
        %v574 = vrot.slane %v547, %v573
        %v576 = vadd.f32 %v569, %v574
        %v577 = vpack.c.bf16 %v576, %v576
        %v578 = vld [vmem:[%s3] sm:$0xf]
        %v579 = vld [vmem:[%s3 + $0x4] sm:$0xf]
        %v580 = vld [vmem:[%s3 + $0x8] sm:$0xf]
        %v581 = vld [vmem:[%s3 + $0xc] sm:$0xf]
        %v582 = vld [vmem:[%s3 + $0x10] sm:$0xf]
        %v583 = vld [vmem:[%s3 + $0x14] sm:$0xf]
        %v584 = vld [vmem:[%s3 + $0x18] sm:$0xf]
        %v585 = vld [vmem:[%s3 + $0x1c] sm:$0xf]
        %v586 = vld [vmem:[%s3 + $0x20] sm:$0xf]
        %v587 = vld [vmem:[%s3 + $0x24] sm:$0xf]
        %v588 = vld [vmem:[%s3 + $0x28] sm:$0xf]
        %v589 = vld [vmem:[%s3 + $0x2c] sm:$0xf]
        %v590 = vld [vmem:[%s3 + $0x30] sm:$0xf]
        %v591 = vld [vmem:[%s3 + $0x34] sm:$0xf]
        %v592 = vld [vmem:[%s3 + $0x38] sm:$0xf]
        %v593 = vld [vmem:[%s3 + $0x3c] sm:$0xf]
        %v594 = vld [vmem:[%s4] sm:$0x1]
        %v595 = vld [vmem:[%s4 + $0x1] sm:$0x1]
        %v596 = vld [vmem:[%s4 + $0x2] sm:$0x1]
        %v597 = vld [vmem:[%s4 + $0x3] sm:$0x1]
        %v602 = vlaneseq
        %v603 = vshrl.u32 %v602, 7
        %v604 = vsub.s32 0, %v603
        %v605 = vrot.slane %v594, %v604
        %v606 = vlaneseq
        %v607 = vshrl.u32 %v606, 7
        %v608 = vsub.s32 0, %v607
        %v609 = vrot.slane %v595, %v608
        %v610 = vlaneseq
        %v611 = vshrl.u32 %v610, 7
        %v612 = vsub.s32 0, %v611
        %v613 = vrot.slane %v596, %v612
        %v614 = vlaneseq
        %v615 = vshrl.u32 %v614, 7
        %v616 = vsub.s32 0, %v615
        %v617 = vrot.slane %v597, %v616
        %v626 = vunpack.c.l.b16 %v578
        %v627 = vunpack.c.l.b16 %v579
        %v628 = vunpack.c.l.b16 %v580
        %v629 = vunpack.c.l.b16 %v581
        %v630 = vpack.c.b16 %v627, %v626
        %v631 = vpack.c.b16 %v629, %v628
        %v635 = vsel %vm548, %v577, 0
        %637 = vmatprep.subr.bf16.mxu0 0
        %638 = vmatpush1.bf16.msra.mxu0 %v630
        %639 = vmatprep.subr.bf16.mxu0 0
        %640 = vmatpush1.bf16.msra.mxu0 %v631
        %641 = vmatprep.subr.bf16.mxu0 0
        %642 = vmatpush1.bf16.msra.mxu0 0
        %643 = vmatprep.subr.bf16.mxu0 0
        %644 = vmatpush1.bf16.msra.mxu0 0
        %645 = vmatprep.subr.bf16.mxu0 0
        %646 = vmatpush1.bf16.msra.mxu0 0
        %647 = vmatprep.subr.bf16.mxu0 0
        %648 = vmatpush1.bf16.msra.mxu0 0
        %649 = vmatprep.subr.bf16.mxu0 0
        %650 = vmatpush1.bf16.msra.mxu0 0
        %651 = vmatprep.subr.bf16.mxu0 0
        %652 = vmatpush1.bf16.msra.mxu0 0
        %653 = vmatprep.subr.bf16.mxu0 0
        %654 = vmatpush1.bf16.msra.mxu0 0
        %655 = vmatprep.subr.bf16.mxu0 0
        %656 = vmatpush1.bf16.msra.mxu0 0
        %657 = vmatprep.subr.bf16.mxu0 0
        %658 = vmatpush1.bf16.msra.mxu0 0
        %659 = vmatprep.subr.bf16.mxu0 0
        %660 = vmatpush1.bf16.msra.mxu0 0
        %661 = vmatprep.subr.bf16.mxu0 0
        %662 = vmatpush1.bf16.msra.mxu0 0
        %663 = vmatprep.subr.bf16.mxu0 0
        %664 = vmatpush1.bf16.msra.mxu0 0
        %665 = vmatprep.subr.bf16.mxu0 0
        %666 = vmatpush1.bf16.msra.mxu0 0
        %667 = vmatprep.subr.bf16.mxu0 0
        %668 = vmatpush1.bf16.msra.mxu0 0
        %669 = vmatprep.mubr.bf16.mxu0 0
        %670 = vmatmul.mubr.bf16.gmra.mrb[0].mxu0 %v635
        %v671 = vpop.f32.mrb[0].mxu0
        %v672 = vadd.f32 %v605, %v671
        %v673 = vpop.f32.mrb[0].mxu0
        %v674 = vpop.f32.mrb[0].mxu0
        %v675 = vpop.f32.mrb[0].mxu0
        %676 = vdwg.mxu0
        %v681 = vunpack.c.l.b16 %v582
        %v682 = vunpack.c.l.b16 %v583
        %v683 = vunpack.c.l.b16 %v584
        %v684 = vunpack.c.l.b16 %v585
        %v685 = vpack.c.b16 %v682, %v681
        %v686 = vpack.c.b16 %v684, %v683
        %689 = vmatprep.subr.bf16.mxu0 0
        %690 = vmatpush1.bf16.msra.mxu0 %v685
        %691 = vmatprep.subr.bf16.mxu0 0
        %692 = vmatpush1.bf16.msra.mxu0 %v686
        %693 = vmatprep.subr.bf16.mxu0 0
        %694 = vmatpush1.bf16.msra.mxu0 0
        %695 = vmatprep.subr.bf16.mxu0 0
        %696 = vmatpush1.bf16.msra.mxu0 0
        %697 = vmatprep.subr.bf16.mxu0 0
        %698 = vmatpush1.bf16.msra.mxu0 0
        %699 = vmatprep.subr.bf16.mxu0 0
        %700 = vmatpush1.bf16.msra.mxu0 0
        %701 = vmatprep.subr.bf16.mxu0 0
        %702 = vmatpush1.bf16.msra.mxu0 0
        %703 = vmatprep.subr.bf16.mxu0 0
        %704 = vmatpush1.bf16.msra.mxu0 0
        %705 = vmatprep.subr.bf16.mxu0 0
        %706 = vmatpush1.bf16.msra.mxu0 0
        %707 = vmatprep.subr.bf16.mxu0 0
        %708 = vmatpush1.bf16.msra.mxu0 0
        %709 = vmatprep.subr.bf16.mxu0 0
        %710 = vmatpush1.bf16.msra.mxu0 0
        %711 = vmatprep.subr.bf16.mxu0 0
        %712 = vmatpush1.bf16.msra.mxu0 0
        %713 = vmatprep.subr.bf16.mxu0 0
        %714 = vmatpush1.bf16.msra.mxu0 0
        %715 = vmatprep.subr.bf16.mxu0 0
        %716 = vmatpush1.bf16.msra.mxu0 0
        %717 = vmatprep.subr.bf16.mxu0 0
        %718 = vmatpush1.bf16.msra.mxu0 0
        %719 = vmatprep.subr.bf16.mxu0 0
        %720 = vmatpush1.bf16.msra.mxu0 0
        %721 = vmatprep.mubr.bf16.mxu0 0
        %722 = vmatmul.mubr.bf16.gmra.mrb[0].mxu0 %v635
        %v723 = vpop.f32.mrb[0].mxu0
        %v724 = vadd.f32 %v609, %v723
        %v725 = vpop.f32.mrb[0].mxu0
        %v726 = vpop.f32.mrb[0].mxu0
        %v727 = vpop.f32.mrb[0].mxu0
        %728 = vdwg.mxu0
        %v733 = vunpack.c.l.b16 %v586
        %v734 = vunpack.c.l.b16 %v587
        %v735 = vunpack.c.l.b16 %v588
        %v736 = vunpack.c.l.b16 %v589
        %v737 = vpack.c.b16 %v734, %v733
        %v738 = vpack.c.b16 %v736, %v735
        %741 = vmatprep.subr.bf16.mxu0 0
        %742 = vmatpush1.bf16.msra.mxu0 %v737
        %743 = vmatprep.subr.bf16.mxu0 0
        %744 = vmatpush1.bf16.msra.mxu0 %v738
        %745 = vmatprep.subr.bf16.mxu0 0
        %746 = vmatpush1.bf16.msra.mxu0 0
        %747 = vmatprep.subr.bf16.mxu0 0
        %748 = vmatpush1.bf16.msra.mxu0 0
        %749 = vmatprep.subr.bf16.mxu0 0
        %750 = vmatpush1.bf16.msra.mxu0 0
        %751 = vmatprep.subr.bf16.mxu0 0
        %752 = vmatpush1.bf16.msra.mxu0 0
        %753 = vmatprep.subr.bf16.mxu0 0
        %754 = vmatpush1.bf16.msra.mxu0 0
        %755 = vmatprep.subr.bf16.mxu0 0
        %756 = vmatpush1.bf16.msra.mxu0 0
        %757 = vmatprep.subr.bf16.mxu0 0
        %758 = vmatpush1.bf16.msra.mxu0 0
        %759 = vmatprep.subr.bf16.mxu0 0
        %760 = vmatpush1.bf16.msra.mxu0 0
        %761 = vmatprep.subr.bf16.mxu0 0
        %762 = vmatpush1.bf16.msra.mxu0 0
        %763 = vmatprep.subr.bf16.mxu0 0
        %764 = vmatpush1.bf16.msra.mxu0 0
        %765 = vmatprep.subr.bf16.mxu0 0
        %766 = vmatpush1.bf16.msra.mxu0 0
        %767 = vmatprep.subr.bf16.mxu0 0
        %768 = vmatpush1.bf16.msra.mxu0 0
        %769 = vmatprep.subr.bf16.mxu0 0
        %770 = vmatpush1.bf16.msra.mxu0 0
        %771 = vmatprep.subr.bf16.mxu0 0
        %772 = vmatpush1.bf16.msra.mxu0 0
        %773 = vmatprep.mubr.bf16.mxu0 0
        %774 = vmatmul.mubr.bf16.gmra.mrb[0].mxu0 %v635
        %v775 = vpop.f32.mrb[0].mxu0
        %v776 = vadd.f32 %v613, %v775
        %v777 = vpop.f32.mrb[0].mxu0
        %v778 = vpop.f32.mrb[0].mxu0
        %v779 = vpop.f32.mrb[0].mxu0
        %780 = vdwg.mxu0
        %v785 = vunpack.c.l.b16 %v590
        %v786 = vunpack.c.l.b16 %v591
        %v787 = vunpack.c.l.b16 %v592
        %v788 = vunpack.c.l.b16 %v593
        %v789 = vpack.c.b16 %v786, %v785
        %v790 = vpack.c.b16 %v788, %v787
        %793 = vmatprep.subr.bf16.mxu0 0
        %794 = vmatpush1.bf16.msra.mxu0 %v789
        %795 = vmatprep.subr.bf16.mxu0 0
        %796 = vmatpush1.bf16.msra.mxu0 %v790
        %797 = vmatprep.subr.bf16.mxu0 0
        %798 = vmatpush1.bf16.msra.mxu0 0
        %799 = vmatprep.subr.bf16.mxu0 0
        %800 = vmatpush1.bf16.msra.mxu0 0
        %801 = vmatprep.subr.bf16.mxu0 0
        %802 = vmatpush1.bf16.msra.mxu0 0
        %803 = vmatprep.subr.bf16.mxu0 0
        %804 = vmatpush1.bf16.msra.mxu0 0
        %805 = vmatprep.subr.bf16.mxu0 0
        %806 = vmatpush1.bf16.msra.mxu0 0
        %807 = vmatprep.subr.bf16.mxu0 0
        %808 = vmatpush1.bf16.msra.mxu0 0
        %809 = vmatprep.subr.bf16.mxu0 0
        %810 = vmatpush1.bf16.msra.mxu0 0
        %811 = vmatprep.subr.bf16.mxu0 0
        %812 = vmatpush1.bf16.msra.mxu0 0
        %813 = vmatprep.subr.bf16.mxu0 0
        %814 = vmatpush1.bf16.msra.mxu0 0
        %815 = vmatprep.subr.bf16.mxu0 0
        %816 = vmatpush1.bf16.msra.mxu0 0
        %817 = vmatprep.subr.bf16.mxu0 0
        %818 = vmatpush1.bf16.msra.mxu0 0
        %819 = vmatprep.subr.bf16.mxu0 0
        %820 = vmatpush1.bf16.msra.mxu0 0
        %821 = vmatprep.subr.bf16.mxu0 0
        %822 = vmatpush1.bf16.msra.mxu0 0
        %823 = vmatprep.subr.bf16.mxu0 0
        %824 = vmatpush1.bf16.msra.mxu0 0
        %825 = vmatprep.mubr.bf16.mxu0 0
        %826 = vmatmul.mubr.bf16.gmra.mrb[0].mxu0 %v635
        %v827 = vpop.f32.mrb[0].mxu0
        %v828 = vadd.f32 %v617, %v827
        %v829 = vpop.f32.mrb[0].mxu0
        %v830 = vpop.f32.mrb[0].mxu0
        %v831 = vpop.f32.mrb[0].mxu0
        %832 = vdwg.mxu0
        %v833 = vld [vmem:[%s5] sm:$0xf]
        %v834 = vld [vmem:[%s5 + $0x4] sm:$0xf]
        %v835 = vld [vmem:[%s5 + $0x8] sm:$0xf]
        %v836 = vld [vmem:[%s5 + $0xc] sm:$0xf]
        %v837 = vld [vmem:[%s5 + $0x10] sm:$0xf]
        %v838 = vld [vmem:[%s5 + $0x14] sm:$0xf]
        %v839 = vld [vmem:[%s5 + $0x18] sm:$0xf]
        %v840 = vld [vmem:[%s5 + $0x1c] sm:$0xf]
        %v841 = vld [vmem:[%s5 + $0x20] sm:$0xf]
        %v842 = vld [vmem:[%s5 + $0x24] sm:$0xf]
        %v843 = vld [vmem:[%s5 + $0x28] sm:$0xf]
        %v844 = vld [vmem:[%s5 + $0x2c] sm:$0xf]
        %v845 = vld [vmem:[%s5 + $0x30] sm:$0xf]
        %v846 = vld [vmem:[%s5 + $0x34] sm:$0xf]
        %v847 = vld [vmem:[%s5 + $0x38] sm:$0xf]
        %v848 = vld [vmem:[%s5 + $0x3c] sm:$0xf]
        %v849 = vld [vmem:[%s6] sm:$0x1]
        %v850 = vld [vmem:[%s6 + $0x1] sm:$0x1]
        %v851 = vld [vmem:[%s6 + $0x2] sm:$0x1]
        %v852 = vld [vmem:[%s6 + $0x3] sm:$0x1]
        %v857 = vlaneseq
        %v858 = vshrl.u32 %v857, 7
        %v859 = vsub.s32 0, %v858
        %v860 = vrot.slane %v849, %v859
        %v861 = vlaneseq
        %v862 = vshrl.u32 %v861, 7
        %v863 = vsub.s32 0, %v862
        %v864 = vrot.slane %v850, %v863
        %v865 = vlaneseq
        %v866 = vshrl.u32 %v865, 7
        %v867 = vsub.s32 0, %v866
        %v868 = vrot.slane %v851, %v867
        %v869 = vlaneseq
        %v870 = vshrl.u32 %v869, 7
        %v871 = vsub.s32 0, %v870
        %v872 = vrot.slane %v852, %v871
        %v881 = vunpack.c.l.b16 %v833
        %v882 = vunpack.c.l.b16 %v834
        %v883 = vunpack.c.l.b16 %v835
        %v884 = vunpack.c.l.b16 %v836
        %v885 = vpack.c.b16 %v882, %v881
        %v886 = vpack.c.b16 %v884, %v883
        %889 = vmatprep.subr.bf16.mxu0 0
        %890 = vmatpush1.bf16.msra.mxu0 %v885
        %891 = vmatprep.subr.bf16.mxu0 0
        %892 = vmatpush1.bf16.msra.mxu0 %v886
        %893 = vmatprep.subr.bf16.mxu0 0
        %894 = vmatpush1.bf16.msra.mxu0 0
        %895 = vmatprep.subr.bf16.mxu0 0
        %896 = vmatpush1.bf16.msra.mxu0 0
        %897 = vmatprep.subr.bf16.mxu0 0
        %898 = vmatpush1.bf16.msra.mxu0 0
        %899 = vmatprep.subr.bf16.mxu0 0
        %900 = vmatpush1.bf16.msra.mxu0 0
        %901 = vmatprep.subr.bf16.mxu0 0
        %902 = vmatpush1.bf16.msra.mxu0 0
        %903 = vmatprep.subr.bf16.mxu0 0
        %904 = vmatpush1.bf16.msra.mxu0 0
        %905 = vmatprep.subr.bf16.mxu0 0
        %906 = vmatpush1.bf16.msra.mxu0 0
        %907 = vmatprep.subr.bf16.mxu0 0
        %908 = vmatpush1.bf16.msra.mxu0 0
        %909 = vmatprep.subr.bf16.mxu0 0
        %910 = vmatpush1.bf16.msra.mxu0 0
        %911 = vmatprep.subr.bf16.mxu0 0
        %912 = vmatpush1.bf16.msra.mxu0 0
        %913 = vmatprep.subr.bf16.mxu0 0
        %914 = vmatpush1.bf16.msra.mxu0 0
        %915 = vmatprep.subr.bf16.mxu0 0
        %916 = vmatpush1.bf16.msra.mxu0 0
        %917 = vmatprep.subr.bf16.mxu0 0
        %918 = vmatpush1.bf16.msra.mxu0 0
        %919 = vmatprep.subr.bf16.mxu0 0
        %920 = vmatpush1.bf16.msra.mxu0 0
        %921 = vmatprep.mubr.bf16.mxu0 0
        %922 = vmatmul.mubr.bf16.gmra.mrb[0].mxu0 %v635
        %v923 = vpop.f32.mrb[0].mxu0
        %v924 = vadd.f32 %v860, %v923
        %v925 = vpop.f32.mrb[0].mxu0
        %v926 = vpop.f32.mrb[0].mxu0
        %v927 = vpop.f32.mrb[0].mxu0
        %928 = vdwg.mxu0
        %v933 = vunpack.c.l.b16 %v837
        %v934 = vunpack.c.l.b16 %v838
        %v935 = vunpack.c.l.b16 %v839
        %v936 = vunpack.c.l.b16 %v840
        %v937 = vpack.c.b16 %v934, %v933
        %v938 = vpack.c.b16 %v936, %v935
        %941 = vmatprep.subr.bf16.mxu0 0
        %942 = vmatpush1.bf16.msra.mxu0 %v937
        %943 = vmatprep.subr.bf16.mxu0 0
        %944 = vmatpush1.bf16.msra.mxu0 %v938
        %945 = vmatprep.subr.bf16.mxu0 0
        %946 = vmatpush1.bf16.msra.mxu0 0
        %947 = vmatprep.subr.bf16.mxu0 0
        %948 = vmatpush1.bf16.msra.mxu0 0
        %949 = vmatprep.subr.bf16.mxu0 0
        %950 = vmatpush1.bf16.msra.mxu0 0
        %951 = vmatprep.subr.bf16.mxu0 0
        %952 = vmatpush1.bf16.msra.mxu0 0
        %953 = vmatprep.subr.bf16.mxu0 0
        %954 = vmatpush1.bf16.msra.mxu0 0
        %955 = vmatprep.subr.bf16.mxu0 0
        %956 = vmatpush1.bf16.msra.mxu0 0
        %957 = vmatprep.subr.bf16.mxu0 0
        %958 = vmatpush1.bf16.msra.mxu0 0
        %959 = vmatprep.subr.bf16.mxu0 0
        %960 = vmatpush1.bf16.msra.mxu0 0
        %961 = vmatprep.subr.bf16.mxu0 0
        %962 = vmatpush1.bf16.msra.mxu0 0
        %963 = vmatprep.subr.bf16.mxu0 0
        %964 = vmatpush1.bf16.msra.mxu0 0
        %965 = vmatprep.subr.bf16.mxu0 0
        %966 = vmatpush1.bf16.msra.mxu0 0
        %967 = vmatprep.subr.bf16.mxu0 0
        %968 = vmatpush1.bf16.msra.mxu0 0
        %969 = vmatprep.subr.bf16.mxu0 0
        %970 = vmatpush1.bf16.msra.mxu0 0
        %971 = vmatprep.subr.bf16.mxu0 0
        %972 = vmatpush1.bf16.msra.mxu0 0
        %973 = vmatprep.mubr.bf16.mxu0 0
        %974 = vmatmul.mubr.bf16.gmra.mrb[0].mxu0 %v635
        %v975 = vpop.f32.mrb[0].mxu0
        %v976 = vadd.f32 %v864, %v975
        %v977 = vpop.f32.mrb[0].mxu0
        %v978 = vpop.f32.mrb[0].mxu0
        %v979 = vpop.f32.mrb[0].mxu0
        %980 = vdwg.mxu0
        %v985 = vunpack.c.l.b16 %v841
        %v986 = vunpack.c.l.b16 %v842
        %v987 = vunpack.c.l.b16 %v843
        %v988 = vunpack.c.l.b16 %v844
        %v989 = vpack.c.b16 %v986, %v985
        %v990 = vpack.c.b16 %v988, %v987
        %993 = vmatprep.subr.bf16.mxu0 0
        %994 = vmatpush1.bf16.msra.mxu0 %v989
        %995 = vmatprep.subr.bf16.mxu0 0
        %996 = vmatpush1.bf16.msra.mxu0 %v990
        %997 = vmatprep.subr.bf16.mxu0 0
        %998 = vmatpush1.bf16.msra.mxu0 0
        %999 = vmatprep.subr.bf16.mxu0 0
        %1000 = vmatpush1.bf16.msra.mxu0 0
        %1001 = vmatprep.subr.bf16.mxu0 0
        %1002 = vmatpush1.bf16.msra.mxu0 0
        %1003 = vmatprep.subr.bf16.mxu0 0
        %1004 = vmatpush1.bf16.msra.mxu0 0
        %1005 = vmatprep.subr.bf16.mxu0 0
        %1006 = vmatpush1.bf16.msra.mxu0 0
        %1007 = vmatprep.subr.bf16.mxu0 0
        %1008 = vmatpush1.bf16.msra.mxu0 0
        %1009 = vmatprep.subr.bf16.mxu0 0
        %1010 = vmatpush1.bf16.msra.mxu0 0
        %1011 = vmatprep.subr.bf16.mxu0 0
        %1012 = vmatpush1.bf16.msra.mxu0 0
        %1013 = vmatprep.subr.bf16.mxu0 0
        %1014 = vmatpush1.bf16.msra.mxu0 0
        %1015 = vmatprep.subr.bf16.mxu0 0
        %1016 = vmatpush1.bf16.msra.mxu0 0
        %1017 = vmatprep.subr.bf16.mxu0 0
        %1018 = vmatpush1.bf16.msra.mxu0 0
        %1019 = vmatprep.subr.bf16.mxu0 0
        %1020 = vmatpush1.bf16.msra.mxu0 0
        %1021 = vmatprep.subr.bf16.mxu0 0
        %1022 = vmatpush1.bf16.msra.mxu0 0
        %1023 = vmatprep.subr.bf16.mxu0 0
        %1024 = vmatpush1.bf16.msra.mxu0 0
        %1025 = vmatprep.mubr.bf16.mxu0 0
        %1026 = vmatmul.mubr.bf16.gmra.mrb[0].mxu0 %v635
        %v1027 = vpop.f32.mrb[0].mxu0
        %v1028 = vadd.f32 %v868, %v1027
        %v1029 = vpop.f32.mrb[0].mxu0
        %v1030 = vpop.f32.mrb[0].mxu0
        %v1031 = vpop.f32.mrb[0].mxu0
        %1032 = vdwg.mxu0
        %v1037 = vunpack.c.l.b16 %v845
        %v1038 = vunpack.c.l.b16 %v846
        %v1039 = vunpack.c.l.b16 %v847
        %v1040 = vunpack.c.l.b16 %v848
        %v1041 = vpack.c.b16 %v1038, %v1037
        %v1042 = vpack.c.b16 %v1040, %v1039
        %1045 = vmatprep.subr.bf16.mxu0 0
        %1046 = vmatpush1.bf16.msra.mxu0 %v1041
        %1047 = vmatprep.subr.bf16.mxu0 0
        %1048 = vmatpush1.bf16.msra.mxu0 %v1042
        %1049 = vmatprep.subr.bf16.mxu0 0
        %1050 = vmatpush1.bf16.msra.mxu0 0
        %1051 = vmatprep.subr.bf16.mxu0 0
        %1052 = vmatpush1.bf16.msra.mxu0 0
        %1053 = vmatprep.subr.bf16.mxu0 0
        %1054 = vmatpush1.bf16.msra.mxu0 0
        %1055 = vmatprep.subr.bf16.mxu0 0
        %1056 = vmatpush1.bf16.msra.mxu0 0
        %1057 = vmatprep.subr.bf16.mxu0 0
        %1058 = vmatpush1.bf16.msra.mxu0 0
        %1059 = vmatprep.subr.bf16.mxu0 0
        %1060 = vmatpush1.bf16.msra.mxu0 0
        %1061 = vmatprep.subr.bf16.mxu0 0
        %1062 = vmatpush1.bf16.msra.mxu0 0
        %1063 = vmatprep.subr.bf16.mxu0 0
        %1064 = vmatpush1.bf16.msra.mxu0 0
        %1065 = vmatprep.subr.bf16.mxu0 0
        %1066 = vmatpush1.bf16.msra.mxu0 0
        %1067 = vmatprep.subr.bf16.mxu0 0
        %1068 = vmatpush1.bf16.msra.mxu0 0
        %1069 = vmatprep.subr.bf16.mxu0 0
        %1070 = vmatpush1.bf16.msra.mxu0 0
        %1071 = vmatprep.subr.bf16.mxu0 0
        %1072 = vmatpush1.bf16.msra.mxu0 0
        %1073 = vmatprep.subr.bf16.mxu0 0
        %1074 = vmatpush1.bf16.msra.mxu0 0
        %1075 = vmatprep.subr.bf16.mxu0 0
        %1076 = vmatpush1.bf16.msra.mxu0 0
        %1077 = vmatprep.mubr.bf16.mxu0 0
        %1078 = vmatmul.mubr.bf16.gmra.mrb[0].mxu0 %v635
        %v1079 = vpop.f32.mrb[0].mxu0
        %v1080 = vadd.f32 %v872, %v1079
        %v1081 = vpop.f32.mrb[0].mxu0
        %v1082 = vpop.f32.mrb[0].mxu0
        %v1083 = vpop.f32.mrb[0].mxu0
        %1084 = vdwg.mxu0
        %v1085 = vld [vmem:[%s7] sm:$0xf]
        %v1086 = vld [vmem:[%s7 + $0x4] sm:$0xf]
        %v1087 = vld [vmem:[%s7 + $0x8] sm:$0xf]
        %v1088 = vld [vmem:[%s7 + $0xc] sm:$0xf]
        %v1089 = vld [vmem:[%s7 + $0x10] sm:$0xf]
        %v1090 = vld [vmem:[%s7 + $0x14] sm:$0xf]
        %v1091 = vld [vmem:[%s7 + $0x18] sm:$0xf]
        %v1092 = vld [vmem:[%s7 + $0x1c] sm:$0xf]
        %v1093 = vld [vmem:[%s7 + $0x20] sm:$0xf]
        %v1094 = vld [vmem:[%s7 + $0x24] sm:$0xf]
        %v1095 = vld [vmem:[%s7 + $0x28] sm:$0xf]
        %v1096 = vld [vmem:[%s7 + $0x2c] sm:$0xf]
        %v1097 = vld [vmem:[%s7 + $0x30] sm:$0xf]
        %v1098 = vld [vmem:[%s7 + $0x34] sm:$0xf]
        %v1099 = vld [vmem:[%s7 + $0x38] sm:$0xf]
        %v1100 = vld [vmem:[%s7 + $0x3c] sm:$0xf]
        %v1101 = vld [vmem:[%s8] sm:$0x1]
        %v1102 = vld [vmem:[%s8 + $0x1] sm:$0x1]
        %v1103 = vld [vmem:[%s8 + $0x2] sm:$0x1]
        %v1104 = vld [vmem:[%s8 + $0x3] sm:$0x1]
        %v1109 = vlaneseq
        %v1110 = vshrl.u32 %v1109, 7
        %v1111 = vsub.s32 0, %v1110
        %v1112 = vrot.slane %v1101, %v1111
        %v1113 = vlaneseq
        %v1114 = vshrl.u32 %v1113, 7
        %v1115 = vsub.s32 0, %v1114
        %v1116 = vrot.slane %v1102, %v1115
        %v1117 = vlaneseq
        %v1118 = vshrl.u32 %v1117, 7
        %v1119 = vsub.s32 0, %v1118
        %v1120 = vrot.slane %v1103, %v1119
        %v1121 = vlaneseq
        %v1122 = vshrl.u32 %v1121, 7
        %v1123 = vsub.s32 0, %v1122
        %v1124 = vrot.slane %v1104, %v1123
        %v1133 = vunpack.c.l.b16 %v1085
        %v1134 = vunpack.c.l.b16 %v1086
        %v1135 = vunpack.c.l.b16 %v1087
        %v1136 = vunpack.c.l.b16 %v1088
        %v1137 = vpack.c.b16 %v1134, %v1133
        %v1138 = vpack.c.b16 %v1136, %v1135
        %1141 = vmatprep.subr.bf16.mxu0 0
        %1142 = vmatpush1.bf16.msra.mxu0 %v1137
        %1143 = vmatprep.subr.bf16.mxu0 0
        %1144 = vmatpush1.bf16.msra.mxu0 %v1138
        %1145 = vmatprep.subr.bf16.mxu0 0
        %1146 = vmatpush1.bf16.msra.mxu0 0
        %1147 = vmatprep.subr.bf16.mxu0 0
        %1148 = vmatpush1.bf16.msra.mxu0 0
        %1149 = vmatprep.subr.bf16.mxu0 0
        %1150 = vmatpush1.bf16.msra.mxu0 0
        %1151 = vmatprep.subr.bf16.mxu0 0
        %1152 = vmatpush1.bf16.msra.mxu0 0
        %1153 = vmatprep.subr.bf16.mxu0 0
        %1154 = vmatpush1.bf16.msra.mxu0 0
        %1155 = vmatprep.subr.bf16.mxu0 0
        %1156 = vmatpush1.bf16.msra.mxu0 0
        %1157 = vmatprep.subr.bf16.mxu0 0
        %1158 = vmatpush1.bf16.msra.mxu0 0
        %1159 = vmatprep.subr.bf16.mxu0 0
        %1160 = vmatpush1.bf16.msra.mxu0 0
        %1161 = vmatprep.subr.bf16.mxu0 0
        %1162 = vmatpush1.bf16.msra.mxu0 0
        %1163 = vmatprep.subr.bf16.mxu0 0
        %1164 = vmatpush1.bf16.msra.mxu0 0
        %1165 = vmatprep.subr.bf16.mxu0 0
        %1166 = vmatpush1.bf16.msra.mxu0 0
        %1167 = vmatprep.subr.bf16.mxu0 0
        %1168 = vmatpush1.bf16.msra.mxu0 0
        %1169 = vmatprep.subr.bf16.mxu0 0
        %1170 = vmatpush1.bf16.msra.mxu0 0
        %1171 = vmatprep.subr.bf16.mxu0 0
        %1172 = vmatpush1.bf16.msra.mxu0 0
        %1173 = vmatprep.mubr.bf16.mxu0 0
        %1174 = vmatmul.mubr.bf16.gmra.mrb[0].mxu0 %v635
        %v1175 = vpop.f32.mrb[0].mxu0
        %v1176 = vadd.f32 %v1112, %v1175
        %v1177 = vpop.f32.mrb[0].mxu0
        %v1178 = vpop.f32.mrb[0].mxu0
        %v1179 = vpop.f32.mrb[0].mxu0
        %1180 = vdwg.mxu0
        %v1185 = vunpack.c.l.b16 %v1089
        %v1186 = vunpack.c.l.b16 %v1090
        %v1187 = vunpack.c.l.b16 %v1091
        %v1188 = vunpack.c.l.b16 %v1092
        %v1189 = vpack.c.b16 %v1186, %v1185
        %v1190 = vpack.c.b16 %v1188, %v1187
        %1193 = vmatprep.subr.bf16.mxu0 0
        %1194 = vmatpush1.bf16.msra.mxu0 %v1189
        %1195 = vmatprep.subr.bf16.mxu0 0
        %1196 = vmatpush1.bf16.msra.mxu0 %v1190
        %1197 = vmatprep.subr.bf16.mxu0 0
        %1198 = vmatpush1.bf16.msra.mxu0 0
        %1199 = vmatprep.subr.bf16.mxu0 0
        %1200 = vmatpush1.bf16.msra.mxu0 0
        %1201 = vmatprep.subr.bf16.mxu0 0
        %1202 = vmatpush1.bf16.msra.mxu0 0
        %1203 = vmatprep.subr.bf16.mxu0 0
        %1204 = vmatpush1.bf16.msra.mxu0 0
        %1205 = vmatprep.subr.bf16.mxu0 0
        %1206 = vmatpush1.bf16.msra.mxu0 0
        %1207 = vmatprep.subr.bf16.mxu0 0
        %1208 = vmatpush1.bf16.msra.mxu0 0
        %1209 = vmatprep.subr.bf16.mxu0 0
        %1210 = vmatpush1.bf16.msra.mxu0 0
        %1211 = vmatprep.subr.bf16.mxu0 0
        %1212 = vmatpush1.bf16.msra.mxu0 0
        %1213 = vmatprep.subr.bf16.mxu0 0
        %1214 = vmatpush1.bf16.msra.mxu0 0
        %1215 = vmatprep.subr.bf16.mxu0 0
        %1216 = vmatpush1.bf16.msra.mxu0 0
        %1217 = vmatprep.subr.bf16.mxu0 0
        %1218 = vmatpush1.bf16.msra.mxu0 0
        %1219 = vmatprep.subr.bf16.mxu0 0
        %1220 = vmatpush1.bf16.msra.mxu0 0
        %1221 = vmatprep.subr.bf16.mxu0 0
        %1222 = vmatpush1.bf16.msra.mxu0 0
        %1223 = vmatprep.subr.bf16.mxu0 0
        %1224 = vmatpush1.bf16.msra.mxu0 0
        %1225 = vmatprep.mubr.bf16.mxu0 0
        %1226 = vmatmul.mubr.bf16.gmra.mrb[0].mxu0 %v635
        %v1227 = vpop.f32.mrb[0].mxu0
        %v1228 = vadd.f32 %v1116, %v1227
        %v1229 = vpop.f32.mrb[0].mxu0
        %v1230 = vpop.f32.mrb[0].mxu0
        %v1231 = vpop.f32.mrb[0].mxu0
        %1232 = vdwg.mxu0
        %v1237 = vunpack.c.l.b16 %v1093
        %v1238 = vunpack.c.l.b16 %v1094
        %v1239 = vunpack.c.l.b16 %v1095
        %v1240 = vunpack.c.l.b16 %v1096
        %v1241 = vpack.c.b16 %v1238, %v1237
        %v1242 = vpack.c.b16 %v1240, %v1239
        %1245 = vmatprep.subr.bf16.mxu0 0
        %1246 = vmatpush1.bf16.msra.mxu0 %v1241
        %1247 = vmatprep.subr.bf16.mxu0 0
        %1248 = vmatpush1.bf16.msra.mxu0 %v1242
        %1249 = vmatprep.subr.bf16.mxu0 0
        %1250 = vmatpush1.bf16.msra.mxu0 0
        %1251 = vmatprep.subr.bf16.mxu0 0
        %1252 = vmatpush1.bf16.msra.mxu0 0
        %1253 = vmatprep.subr.bf16.mxu0 0
        %1254 = vmatpush1.bf16.msra.mxu0 0
        %1255 = vmatprep.subr.bf16.mxu0 0
        %1256 = vmatpush1.bf16.msra.mxu0 0
        %1257 = vmatprep.subr.bf16.mxu0 0
        %1258 = vmatpush1.bf16.msra.mxu0 0
        %1259 = vmatprep.subr.bf16.mxu0 0
        %1260 = vmatpush1.bf16.msra.mxu0 0
        %1261 = vmatprep.subr.bf16.mxu0 0
        %1262 = vmatpush1.bf16.msra.mxu0 0
        %1263 = vmatprep.subr.bf16.mxu0 0
        %1264 = vmatpush1.bf16.msra.mxu0 0
        %1265 = vmatprep.subr.bf16.mxu0 0
        %1266 = vmatpush1.bf16.msra.mxu0 0
        %1267 = vmatprep.subr.bf16.mxu0 0
        %1268 = vmatpush1.bf16.msra.mxu0 0
        %1269 = vmatprep.subr.bf16.mxu0 0
        %1270 = vmatpush1.bf16.msra.mxu0 0
        %1271 = vmatprep.subr.bf16.mxu0 0
        %1272 = vmatpush1.bf16.msra.mxu0 0
        %1273 = vmatprep.subr.bf16.mxu0 0
        %1274 = vmatpush1.bf16.msra.mxu0 0
        %1275 = vmatprep.subr.bf16.mxu0 0
        %1276 = vmatpush1.bf16.msra.mxu0 0
        %1277 = vmatprep.mubr.bf16.mxu0 0
        %1278 = vmatmul.mubr.bf16.gmra.mrb[0].mxu0 %v635
        %v1279 = vpop.f32.mrb[0].mxu0
        %v1280 = vadd.f32 %v1120, %v1279
        %v1281 = vpop.f32.mrb[0].mxu0
        %v1282 = vpop.f32.mrb[0].mxu0
        %v1283 = vpop.f32.mrb[0].mxu0
        %1284 = vdwg.mxu0
        %v1289 = vunpack.c.l.b16 %v1097
        %v1290 = vunpack.c.l.b16 %v1098
        %v1291 = vunpack.c.l.b16 %v1099
        %v1292 = vunpack.c.l.b16 %v1100
        %v1293 = vpack.c.b16 %v1290, %v1289
        %v1294 = vpack.c.b16 %v1292, %v1291
        %1297 = vmatprep.subr.bf16.mxu0 0
        %1298 = vmatpush1.bf16.msra.mxu0 %v1293
        %1299 = vmatprep.subr.bf16.mxu0 0
        %1300 = vmatpush1.bf16.msra.mxu0 %v1294
        %1301 = vmatprep.subr.bf16.mxu0 0
        %1302 = vmatpush1.bf16.msra.mxu0 0
        %1303 = vmatprep.subr.bf16.mxu0 0
        %1304 = vmatpush1.bf16.msra.mxu0 0
        %1305 = vmatprep.subr.bf16.mxu0 0
        %1306 = vmatpush1.bf16.msra.mxu0 0
        %1307 = vmatprep.subr.bf16.mxu0 0
        %1308 = vmatpush1.bf16.msra.mxu0 0
        %1309 = vmatprep.subr.bf16.mxu0 0
        %1310 = vmatpush1.bf16.msra.mxu0 0
        %1311 = vmatprep.subr.bf16.mxu0 0
        %1312 = vmatpush1.bf16.msra.mxu0 0
        %1313 = vmatprep.subr.bf16.mxu0 0
        %1314 = vmatpush1.bf16.msra.mxu0 0
        %1315 = vmatprep.subr.bf16.mxu0 0
        %1316 = vmatpush1.bf16.msra.mxu0 0
        %1317 = vmatprep.subr.bf16.mxu0 0
        %1318 = vmatpush1.bf16.msra.mxu0 0
        %1319 = vmatprep.subr.bf16.mxu0 0
        %1320 = vmatpush1.bf16.msra.mxu0 0
        %1321 = vmatprep.subr.bf16.mxu0 0
        %1322 = vmatpush1.bf16.msra.mxu0 0
        %1323 = vmatprep.subr.bf16.mxu0 0
        %1324 = vmatpush1.bf16.msra.mxu0 0
        %1325 = vmatprep.subr.bf16.mxu0 0
        %1326 = vmatpush1.bf16.msra.mxu0 0
        %1327 = vmatprep.subr.bf16.mxu0 0
        %1328 = vmatpush1.bf16.msra.mxu0 0
        %1329 = vmatprep.mubr.bf16.mxu0 0
        %1330 = vmatmul.mubr.bf16.gmra.mrb[0].mxu0 %v635
        %v1331 = vpop.f32.mrb[0].mxu0
        %v1332 = vadd.f32 %v1124, %v1331
        %v1333 = vpop.f32.mrb[0].mxu0
        %v1334 = vpop.f32.mrb[0].mxu0
        %v1335 = vpop.f32.mrb[0].mxu0
        %1336 = vdwg.mxu0
        %v1337 = vpack.c.bf16 %v672, %v672
        %v1338 = vpack.c.bf16 %v724, %v724
        %v1339 = vpack.c.bf16 %v776, %v776
        %v1340 = vpack.c.bf16 %v828, %v828
        %v1341 = vpack.c.bf16 %v924, %v924
        %v1342 = vpack.c.bf16 %v976, %v976
        %v1343 = vpack.c.bf16 %v1028, %v1028
        %v1344 = vpack.c.bf16 %v1080, %v1080
        %vm1345 = vcmask 64512
        %v1347 = vsel %vm1345, %v1337, 0
        %v1350 = vsel %vm1345, %v1341, 0
        %1352 = vmatprep.subr.bf16.mxu0 0
        %1353 = vmatpush1.bf16.xpose.msra.mxu0 %v1350
        %1354 = vmatprep.subr.bf16.mxu0 0
        %1355 = vmatpush1.bf16.xpose.msra.mxu0 0
        %1356 = vmatprep.subr.bf16.mxu0 0
        %1357 = vmatpush1.bf16.xpose.msra.mxu0 0
        %1358 = vmatprep.subr.bf16.mxu0 0
        %1359 = vmatpush1.bf16.xpose.msra.mxu0 0
        %1360 = vmatprep.subr.bf16.mxu0 0
        %1361 = vmatpush1.bf16.xpose.msra.mxu0 0
        %1362 = vmatprep.subr.bf16.mxu0 0
        %1363 = vmatpush1.bf16.xpose.msra.mxu0 0
        %1364 = vmatprep.subr.bf16.mxu0 0
        %1365 = vmatpush1.bf16.xpose.msra.mxu0 0
        %1366 = vmatprep.subr.bf16.mxu0 0
        %1367 = vmatpush1.bf16.xpose.msra.mxu0 0
        %1368 = vmatprep.subr.bf16.mxu0 0
        %1369 = vmatpush1.bf16.xpose.msra.mxu0 0
        %1370 = vmatprep.subr.bf16.mxu0 0
        %1371 = vmatpush1.bf16.xpose.msra.mxu0 0
        %1372 = vmatprep.subr.bf16.mxu0 0
        %1373 = vmatpush1.bf16.xpose.msra.mxu0 0
        %1374 = vmatprep.subr.bf16.mxu0 0
        %1375 = vmatpush1.bf16.xpose.msra.mxu0 0
        %1376 = vmatprep.subr.bf16.mxu0 0
        %1377 = vmatpush1.bf16.xpose.msra.mxu0 0
        %1378 = vmatprep.subr.bf16.mxu0 0
        %1379 = vmatpush1.bf16.xpose.msra.mxu0 0
        %1380 = vmatprep.subr.bf16.mxu0 0
        %1381 = vmatpush1.bf16.xpose.msra.mxu0 0
        %1382 = vmatprep.subr.bf16.mxu0 0
        %1383 = vmatpush1.bf16.xpose.msra.mxu0 0
        %1384 = vmatprep.mubr.bf16.mxu0 0
        %1385 = vmatmul.mubr.bf16.gmra.mrb[0].mxu0 %v1347
        %v1386 = vpop.f32.mrb[0].mxu0
        %v1387 = vadd.f32 0.0, %v1386
        %v1388 = vpop.f32.mrb[0].mxu0
        %v1389 = vpop.f32.mrb[0].mxu0
        %v1390 = vpop.f32.mrb[0].mxu0
        %1391 = vdwg.mxu0
        %v1393 = vsel %vm1345, %v1338, 0
        %v1396 = vsel %vm1345, %v1342, 0
        %1398 = vmatprep.subr.bf16.mxu0 0
        %1399 = vmatpush1.bf16.xpose.msra.mxu0 %v1396
        %1400 = vmatprep.subr.bf16.mxu0 0
        %1401 = vmatpush1.bf16.xpose.msra.mxu0 0
        %1402 = vmatprep.subr.bf16.mxu0 0
        %1403 = vmatpush1.bf16.xpose.msra.mxu0 0
        %1404 = vmatprep.subr.bf16.mxu0 0
        %1405 = vmatpush1.bf16.xpose.msra.mxu0 0
        %1406 = vmatprep.subr.bf16.mxu0 0
        %1407 = vmatpush1.bf16.xpose.msra.mxu0 0
        %1408 = vmatprep.subr.bf16.mxu0 0
        %1409 = vmatpush1.bf16.xpose.msra.mxu0 0
        %1410 = vmatprep.subr.bf16.mxu0 0
        %1411 = vmatpush1.bf16.xpose.msra.mxu0 0
        %1412 = vmatprep.subr.bf16.mxu0 0
        %1413 = vmatpush1.bf16.xpose.msra.mxu0 0
        %1414 = vmatprep.subr.bf16.mxu0 0
        %1415 = vmatpush1.bf16.xpose.msra.mxu0 0
        %1416 = vmatprep.subr.bf16.mxu0 0
        %1417 = vmatpush1.bf16.xpose.msra.mxu0 0
        %1418 = vmatprep.subr.bf16.mxu0 0
        %1419 = vmatpush1.bf16.xpose.msra.mxu0 0
        %1420 = vmatprep.subr.bf16.mxu0 0
        %1421 = vmatpush1.bf16.xpose.msra.mxu0 0
        %1422 = vmatprep.subr.bf16.mxu0 0
        %1423 = vmatpush1.bf16.xpose.msra.mxu0 0
        %1424 = vmatprep.subr.bf16.mxu0 0
        %1425 = vmatpush1.bf16.xpose.msra.mxu0 0
        %1426 = vmatprep.subr.bf16.mxu0 0
        %1427 = vmatpush1.bf16.xpose.msra.mxu0 0
        %1428 = vmatprep.subr.bf16.mxu0 0
        %1429 = vmatpush1.bf16.xpose.msra.mxu0 0
        %1430 = vmatprep.mubr.bf16.mxu0 0
        %1431 = vmatmul.mubr.bf16.gmra.mrb[0].mxu0 %v1393
        %v1432 = vpop.f32.mrb[0].mxu0
        %v1433 = vadd.f32 0.0, %v1432
        %v1434 = vpop.f32.mrb[0].mxu0
        %v1435 = vpop.f32.mrb[0].mxu0
        %v1436 = vpop.f32.mrb[0].mxu0
        %1437 = vdwg.mxu0
        %v1439 = vsel %vm1345, %v1339, 0
        %v1442 = vsel %vm1345, %v1343, 0
        %1444 = vmatprep.subr.bf16.mxu0 0
        %1445 = vmatpush1.bf16.xpose.msra.mxu0 %v1442
        %1446 = vmatprep.subr.bf16.mxu0 0
        %1447 = vmatpush1.bf16.xpose.msra.mxu0 0
        %1448 = vmatprep.subr.bf16.mxu0 0
        %1449 = vmatpush1.bf16.xpose.msra.mxu0 0
        %1450 = vmatprep.subr.bf16.mxu0 0
        %1451 = vmatpush1.bf16.xpose.msra.mxu0 0
        %1452 = vmatprep.subr.bf16.mxu0 0
        %1453 = vmatpush1.bf16.xpose.msra.mxu0 0
        %1454 = vmatprep.subr.bf16.mxu0 0
        %1455 = vmatpush1.bf16.xpose.msra.mxu0 0
        %1456 = vmatprep.subr.bf16.mxu0 0
        %1457 = vmatpush1.bf16.xpose.msra.mxu0 0
        %1458 = vmatprep.subr.bf16.mxu0 0
        %1459 = vmatpush1.bf16.xpose.msra.mxu0 0
        %1460 = vmatprep.subr.bf16.mxu0 0
        %1461 = vmatpush1.bf16.xpose.msra.mxu0 0
        %1462 = vmatprep.subr.bf16.mxu0 0
        %1463 = vmatpush1.bf16.xpose.msra.mxu0 0
        %1464 = vmatprep.subr.bf16.mxu0 0
        %1465 = vmatpush1.bf16.xpose.msra.mxu0 0
        %1466 = vmatprep.subr.bf16.mxu0 0
        %1467 = vmatpush1.bf16.xpose.msra.mxu0 0
        %1468 = vmatprep.subr.bf16.mxu0 0
        %1469 = vmatpush1.bf16.xpose.msra.mxu0 0
        %1470 = vmatprep.subr.bf16.mxu0 0
        %1471 = vmatpush1.bf16.xpose.msra.mxu0 0
        %1472 = vmatprep.subr.bf16.mxu0 0
        %1473 = vmatpush1.bf16.xpose.msra.mxu0 0
        %1474 = vmatprep.subr.bf16.mxu0 0
        %1475 = vmatpush1.bf16.xpose.msra.mxu0 0
        %1476 = vmatprep.mubr.bf16.mxu0 0
        %1477 = vmatmul.mubr.bf16.gmra.mrb[0].mxu0 %v1439
        %v1478 = vpop.f32.mrb[0].mxu0
        %v1479 = vadd.f32 0.0, %v1478
        %v1480 = vpop.f32.mrb[0].mxu0
        %v1481 = vpop.f32.mrb[0].mxu0
        %v1482 = vpop.f32.mrb[0].mxu0
        %1483 = vdwg.mxu0
        %v1485 = vsel %vm1345, %v1340, 0
        %v1488 = vsel %vm1345, %v1344, 0
        %1490 = vmatprep.subr.bf16.mxu0 0
        %1491 = vmatpush1.bf16.xpose.msra.mxu0 %v1488
        %1492 = vmatprep.subr.bf16.mxu0 0
        %1493 = vmatpush1.bf16.xpose.msra.mxu0 0
        %1494 = vmatprep.subr.bf16.mxu0 0
        %1495 = vmatpush1.bf16.xpose.msra.mxu0 0
        %1496 = vmatprep.subr.bf16.mxu0 0
        %1497 = vmatpush1.bf16.xpose.msra.mxu0 0
        %1498 = vmatprep.subr.bf16.mxu0 0
        %1499 = vmatpush1.bf16.xpose.msra.mxu0 0
        %1500 = vmatprep.subr.bf16.mxu0 0
        %1501 = vmatpush1.bf16.xpose.msra.mxu0 0
        %1502 = vmatprep.subr.bf16.mxu0 0
        %1503 = vmatpush1.bf16.xpose.msra.mxu0 0
        %1504 = vmatprep.subr.bf16.mxu0 0
        %1505 = vmatpush1.bf16.xpose.msra.mxu0 0
        %1506 = vmatprep.subr.bf16.mxu0 0
        %1507 = vmatpush1.bf16.xpose.msra.mxu0 0
        %1508 = vmatprep.subr.bf16.mxu0 0
        %1509 = vmatpush1.bf16.xpose.msra.mxu0 0
        %1510 = vmatprep.subr.bf16.mxu0 0
        %1511 = vmatpush1.bf16.xpose.msra.mxu0 0
        %1512 = vmatprep.subr.bf16.mxu0 0
        %1513 = vmatpush1.bf16.xpose.msra.mxu0 0
        %1514 = vmatprep.subr.bf16.mxu0 0
        %1515 = vmatpush1.bf16.xpose.msra.mxu0 0
        %1516 = vmatprep.subr.bf16.mxu0 0
        %1517 = vmatpush1.bf16.xpose.msra.mxu0 0
        %1518 = vmatprep.subr.bf16.mxu0 0
        %1519 = vmatpush1.bf16.xpose.msra.mxu0 0
        %1520 = vmatprep.subr.bf16.mxu0 0
        %1521 = vmatpush1.bf16.xpose.msra.mxu0 0
        %1522 = vmatprep.mubr.bf16.mxu0 0
        %1523 = vmatmul.mubr.bf16.gmra.mrb[0].mxu0 %v1485
        %v1524 = vpop.f32.mrb[0].mxu0
        %v1525 = vadd.f32 0.0, %v1524
        %v1526 = vpop.f32.mrb[0].mxu0
        %v1527 = vpop.f32.mrb[0].mxu0
        %v1528 = vpop.f32.mrb[0].mxu0
        %1529 = vdwg.mxu0
        %v1530 = vsel %vm1345, %v1387, -inf
        %1531 = vmax.xlane.f32.xlu0 %v1530
        %v1532 = vpop.xlane.xlu0 %1531
        %v1533 = vsel %vm1345, %v1433, -inf
        %1534 = vmax.xlane.f32.xlu0 %v1533
        %v1535 = vpop.xlane.xlu0 %1534
        %v1536 = vsel %vm1345, %v1479, -inf
        %1537 = vmax.xlane.f32.xlu0 %v1536
        %v1538 = vpop.xlane.xlu0 %1537
        %v1539 = vsel %vm1345, %v1525, -inf
        %1540 = vmax.xlane.f32.xlu0 %v1539
        %v1541 = vpop.xlane.xlu0 %1540
        %v1542 = vsub.f32 %v1387, %v1532
        %v1543 = vsub.f32 %v1433, %v1535
        %v1544 = vsub.f32 %v1479, %v1538
        %v1545 = vsub.f32 %v1525, %v1541
        %v1546 = vmul.f32 %v1542, 1.442695
        %v1547 = vpow.pop %v1546
        %v1548 = vmul.f32 %v1543, 1.442695
        %v1549 = vpow.pop %v1548
        %v1550 = vmul.f32 %v1544, 1.442695
        %v1551 = vpow.pop %v1550
        %v1552 = vmul.f32 %v1545, 1.442695
        %v1553 = vpow.pop %v1552
        %v1554 = vsel %vm1345, %v1547, 0.0
        %1555 = vadd.xlane.f32.xlu0 %v1554
        %v1556 = vpop.xlane.xlu0 %1555
        %v1557 = vsel %vm1345, %v1549, 0.0
        %1558 = vadd.xlane.f32.xlu0 %v1557
        %v1559 = vpop.xlane.xlu0 %1558
        %v1560 = vsel %vm1345, %v1551, 0.0
        %1561 = vadd.xlane.f32.xlu0 %v1560
        %v1562 = vpop.xlane.xlu0 %1561
        %v1563 = vsel %vm1345, %v1553, 0.0
        %1564 = vadd.xlane.f32.xlu0 %v1563
        %v1565 = vpop.xlane.xlu0 %1564
        %v1566 = vrcp.pop %v1556
        %v1567 = vmul.f32 %v1547, %v1566
        %v1568 = vrcp.pop %v1559
        %v1569 = vmul.f32 %v1549, %v1568
        %v1570 = vrcp.pop %v1562
        %v1571 = vmul.f32 %v1551, %v1570
        %v1572 = vrcp.pop %v1565
        %v1573 = vmul.f32 %v1553, %v1572
        %v1574 = vpack.c.bf16 %v1567, %v1567
        %v1575 = vpack.c.bf16 %v1569, %v1569
        %v1576 = vpack.c.bf16 %v1571, %v1571
        %v1577 = vpack.c.bf16 %v1573, %v1573
        %v1578 = vpack.c.bf16 %v1176, %v1176
        %v1579 = vpack.c.bf16 %v1228, %v1228
        %v1580 = vpack.c.bf16 %v1280, %v1280
        %v1581 = vpack.c.bf16 %v1332, %v1332
        %v1583 = vsel %vm1345, %v1574, 0
        %vm1585 = vcmask 1043456
        %v1587 = vsel %vm1585, %v1578, 0
        %1589 = vmatprep.subr.bf16.mxu0 0
        %1590 = vmatpush1.bf16.msra.mxu0 %v1587
        %1591 = vmatprep.subr.bf16.mxu0 0
        %1592 = vmatpush1.bf16.msra.mxu0 0
        %1593 = vmatprep.subr.bf16.mxu0 0
        %1594 = vmatpush1.bf16.msra.mxu0 0
        %1595 = vmatprep.subr.bf16.mxu0 0
        %1596 = vmatpush1.bf16.msra.mxu0 0
        %1597 = vmatprep.subr.bf16.mxu0 0
        %1598 = vmatpush1.bf16.msra.mxu0 0
        %1599 = vmatprep.subr.bf16.mxu0 0
        %1600 = vmatpush1.bf16.msra.mxu0 0
        %1601 = vmatprep.subr.bf16.mxu0 0
        %1602 = vmatpush1.bf16.msra.mxu0 0
        %1603 = vmatprep.subr.bf16.mxu0 0
        %1604 = vmatpush1.bf16.msra.mxu0 0
        %1605 = vmatprep.subr.bf16.mxu0 0
        %1606 = vmatpush1.bf16.msra.mxu0 0
        %1607 = vmatprep.subr.bf16.mxu0 0
        %1608 = vmatpush1.bf16.msra.mxu0 0
        %1609 = vmatprep.subr.bf16.mxu0 0
        %1610 = vmatpush1.bf16.msra.mxu0 0
        %1611 = vmatprep.subr.bf16.mxu0 0
        %1612 = vmatpush1.bf16.msra.mxu0 0
        %1613 = vmatprep.subr.bf16.mxu0 0
        %1614 = vmatpush1.bf16.msra.mxu0 0
        %1615 = vmatprep.subr.bf16.mxu0 0
        %1616 = vmatpush1.bf16.msra.mxu0 0
        %1617 = vmatprep.subr.bf16.mxu0 0
        %1618 = vmatpush1.bf16.msra.mxu0 0
        %1619 = vmatprep.subr.bf16.mxu0 0
        %1620 = vmatpush1.bf16.msra.mxu0 0
        %1621 = vmatprep.mubr.bf16.mxu0 0
        %1622 = vmatmul.mubr.bf16.gmra.mrb[0].mxu0 %v1583
        %v1623 = vpop.f32.mrb[0].mxu0
        %v1624 = vadd.f32 0.0, %v1623
        %v1625 = vpop.f32.mrb[0].mxu0
        %v1626 = vpop.f32.mrb[0].mxu0
        %v1627 = vpop.f32.mrb[0].mxu0
        %1628 = vdwg.mxu0
        %v1630 = vsel %vm1345, %v1575, 0
        %v1633 = vsel %vm1585, %v1579, 0
        %1635 = vmatprep.subr.bf16.mxu0 0
        %1636 = vmatpush1.bf16.msra.mxu0 %v1633
        %1637 = vmatprep.subr.bf16.mxu0 0
        %1638 = vmatpush1.bf16.msra.mxu0 0
        %1639 = vmatprep.subr.bf16.mxu0 0
        %1640 = vmatpush1.bf16.msra.mxu0 0
        %1641 = vmatprep.subr.bf16.mxu0 0
        %1642 = vmatpush1.bf16.msra.mxu0 0
        %1643 = vmatprep.subr.bf16.mxu0 0
        %1644 = vmatpush1.bf16.msra.mxu0 0
        %1645 = vmatprep.subr.bf16.mxu0 0
        %1646 = vmatpush1.bf16.msra.mxu0 0
        %1647 = vmatprep.subr.bf16.mxu0 0
        %1648 = vmatpush1.bf16.msra.mxu0 0
        %1649 = vmatprep.subr.bf16.mxu0 0
        %1650 = vmatpush1.bf16.msra.mxu0 0
        %1651 = vmatprep.subr.bf16.mxu0 0
        %1652 = vmatpush1.bf16.msra.mxu0 0
        %1653 = vmatprep.subr.bf16.mxu0 0
        %1654 = vmatpush1.bf16.msra.mxu0 0
        %1655 = vmatprep.subr.bf16.mxu0 0
        %1656 = vmatpush1.bf16.msra.mxu0 0
        %1657 = vmatprep.subr.bf16.mxu0 0
        %1658 = vmatpush1.bf16.msra.mxu0 0
        %1659 = vmatprep.subr.bf16.mxu0 0
        %1660 = vmatpush1.bf16.msra.mxu0 0
        %1661 = vmatprep.subr.bf16.mxu0 0
        %1662 = vmatpush1.bf16.msra.mxu0 0
        %1663 = vmatprep.subr.bf16.mxu0 0
        %1664 = vmatpush1.bf16.msra.mxu0 0
        %1665 = vmatprep.subr.bf16.mxu0 0
        %1666 = vmatpush1.bf16.msra.mxu0 0
        %1667 = vmatprep.mubr.bf16.mxu0 0
        %1668 = vmatmul.mubr.bf16.gmra.mrb[0].mxu0 %v1630
        %v1669 = vpop.f32.mrb[0].mxu0
        %v1670 = vadd.f32 0.0, %v1669
        %v1671 = vpop.f32.mrb[0].mxu0
        %v1672 = vpop.f32.mrb[0].mxu0
        %v1673 = vpop.f32.mrb[0].mxu0
        %1674 = vdwg.mxu0
        %v1676 = vsel %vm1345, %v1576, 0
        %v1679 = vsel %vm1585, %v1580, 0
        %1681 = vmatprep.subr.bf16.mxu0 0
        %1682 = vmatpush1.bf16.msra.mxu0 %v1679
        %1683 = vmatprep.subr.bf16.mxu0 0
        %1684 = vmatpush1.bf16.msra.mxu0 0
        %1685 = vmatprep.subr.bf16.mxu0 0
        %1686 = vmatpush1.bf16.msra.mxu0 0
        %1687 = vmatprep.subr.bf16.mxu0 0
        %1688 = vmatpush1.bf16.msra.mxu0 0
        %1689 = vmatprep.subr.bf16.mxu0 0
        %1690 = vmatpush1.bf16.msra.mxu0 0
        %1691 = vmatprep.subr.bf16.mxu0 0
        %1692 = vmatpush1.bf16.msra.mxu0 0
        %1693 = vmatprep.subr.bf16.mxu0 0
        %1694 = vmatpush1.bf16.msra.mxu0 0
        %1695 = vmatprep.subr.bf16.mxu0 0
        %1696 = vmatpush1.bf16.msra.mxu0 0
        %1697 = vmatprep.subr.bf16.mxu0 0
        %1698 = vmatpush1.bf16.msra.mxu0 0
        %1699 = vmatprep.subr.bf16.mxu0 0
        %1700 = vmatpush1.bf16.msra.mxu0 0
        %1701 = vmatprep.subr.bf16.mxu0 0
        %1702 = vmatpush1.bf16.msra.mxu0 0
        %1703 = vmatprep.subr.bf16.mxu0 0
        %1704 = vmatpush1.bf16.msra.mxu0 0
        %1705 = vmatprep.subr.bf16.mxu0 0
        %1706 = vmatpush1.bf16.msra.mxu0 0
        %1707 = vmatprep.subr.bf16.mxu0 0
        %1708 = vmatpush1.bf16.msra.mxu0 0
        %1709 = vmatprep.subr.bf16.mxu0 0
        %1710 = vmatpush1.bf16.msra.mxu0 0
        %1711 = vmatprep.subr.bf16.mxu0 0
        %1712 = vmatpush1.bf16.msra.mxu0 0
        %1713 = vmatprep.mubr.bf16.mxu0 0
        %1714 = vmatmul.mubr.bf16.gmra.mrb[0].mxu0 %v1676
        %v1715 = vpop.f32.mrb[0].mxu0
        %v1716 = vadd.f32 0.0, %v1715
        %v1717 = vpop.f32.mrb[0].mxu0
        %v1718 = vpop.f32.mrb[0].mxu0
        %v1719 = vpop.f32.mrb[0].mxu0
        %1720 = vdwg.mxu0
        %v1722 = vsel %vm1345, %v1577, 0
        %v1725 = vsel %vm1585, %v1581, 0
        %1727 = vmatprep.subr.bf16.mxu0 0
        %1728 = vmatpush1.bf16.msra.mxu0 %v1725
        %1729 = vmatprep.subr.bf16.mxu0 0
        %1730 = vmatpush1.bf16.msra.mxu0 0
        %1731 = vmatprep.subr.bf16.mxu0 0
        %1732 = vmatpush1.bf16.msra.mxu0 0
        %1733 = vmatprep.subr.bf16.mxu0 0
        %1734 = vmatpush1.bf16.msra.mxu0 0
        %1735 = vmatprep.subr.bf16.mxu0 0
        %1736 = vmatpush1.bf16.msra.mxu0 0
        %1737 = vmatprep.subr.bf16.mxu0 0
        %1738 = vmatpush1.bf16.msra.mxu0 0
        %1739 = vmatprep.subr.bf16.mxu0 0
        %1740 = vmatpush1.bf16.msra.mxu0 0
        %1741 = vmatprep.subr.bf16.mxu0 0
        %1742 = vmatpush1.bf16.msra.mxu0 0
        %1743 = vmatprep.subr.bf16.mxu0 0
        %1744 = vmatpush1.bf16.msra.mxu0 0
        %1745 = vmatprep.subr.bf16.mxu0 0
        %1746 = vmatpush1.bf16.msra.mxu0 0
        %1747 = vmatprep.subr.bf16.mxu0 0
        %1748 = vmatpush1.bf16.msra.mxu0 0
        %1749 = vmatprep.subr.bf16.mxu0 0
        %1750 = vmatpush1.bf16.msra.mxu0 0
        %1751 = vmatprep.subr.bf16.mxu0 0
        %1752 = vmatpush1.bf16.msra.mxu0 0
        %1753 = vmatprep.subr.bf16.mxu0 0
        %1754 = vmatpush1.bf16.msra.mxu0 0
        %1755 = vmatprep.subr.bf16.mxu0 0
        %1756 = vmatpush1.bf16.msra.mxu0 0
        %1757 = vmatprep.subr.bf16.mxu0 0
        %1758 = vmatpush1.bf16.msra.mxu0 0
        %1759 = vmatprep.mubr.bf16.mxu0 0
        %1760 = vmatmul.mubr.bf16.gmra.mrb[0].mxu0 %v1722
        %v1761 = vpop.f32.mrb[0].mxu0
        %v1762 = vadd.f32 0.0, %v1761
        %v1763 = vpop.f32.mrb[0].mxu0
        %v1764 = vpop.f32.mrb[0].mxu0
        %v1765 = vpop.f32.mrb[0].mxu0
        %1766 = vdwg.mxu0
        %v1767 = vpack.c.bf16 %v1624, %v1624
        %v1768 = vpack.c.bf16 %v1670, %v1670
        %v1769 = vpack.c.bf16 %v1716, %v1716
        %v1770 = vpack.c.bf16 %v1762, %v1762
        %v1771 = vld [vmem:[%s9] sm:$0xf]
        %v1772 = vld [vmem:[%s9 + $0x4] sm:$0xf]
        %v1773 = vld [vmem:[%s9 + $0x8] sm:$0xf]
        %v1774 = vld [vmem:[%s9 + $0xc] sm:$0xf]
        %v1776 = vsel %vm1345, %v1767, 0
        %v1779 = vsel %vm1585, %v1771, 0
        %1781 = vmatprep.subr.bf16.mxu0 0
        %1782 = vmatpush1.bf16.msra.mxu0 %v1779
        %1783 = vmatprep.subr.bf16.mxu0 0
        %1784 = vmatpush1.bf16.msra.mxu0 0
        %1785 = vmatprep.subr.bf16.mxu0 0
        %1786 = vmatpush1.bf16.msra.mxu0 0
        %1787 = vmatprep.subr.bf16.mxu0 0
        %1788 = vmatpush1.bf16.msra.mxu0 0
        %1789 = vmatprep.subr.bf16.mxu0 0
        %1790 = vmatpush1.bf16.msra.mxu0 0
        %1791 = vmatprep.subr.bf16.mxu0 0
        %1792 = vmatpush1.bf16.msra.mxu0 0
        %1793 = vmatprep.subr.bf16.mxu0 0
        %1794 = vmatpush1.bf16.msra.mxu0 0
        %1795 = vmatprep.subr.bf16.mxu0 0
        %1796 = vmatpush1.bf16.msra.mxu0 0
        %1797 = vmatprep.subr.bf16.mxu0 0
        %1798 = vmatpush1.bf16.msra.mxu0 0
        %1799 = vmatprep.subr.bf16.mxu0 0
        %1800 = vmatpush1.bf16.msra.mxu0 0
        %1801 = vmatprep.subr.bf16.mxu0 0
        %1802 = vmatpush1.bf16.msra.mxu0 0
        %1803 = vmatprep.subr.bf16.mxu0 0
        %1804 = vmatpush1.bf16.msra.mxu0 0
        %1805 = vmatprep.subr.bf16.mxu0 0
        %1806 = vmatpush1.bf16.msra.mxu0 0
        %1807 = vmatprep.subr.bf16.mxu0 0
        %1808 = vmatpush1.bf16.msra.mxu0 0
        %1809 = vmatprep.subr.bf16.mxu0 0
        %1810 = vmatpush1.bf16.msra.mxu0 0
        %1811 = vmatprep.subr.bf16.mxu0 0
        %1812 = vmatpush1.bf16.msra.mxu0 0
        %1813 = vmatprep.mubr.bf16.mxu0 0
        %1814 = vmatmul.mubr.bf16.gmra.mrb[0].mxu0 %v1776
        %v1815 = vpop.f32.mrb[0].mxu0
        %v1816 = vadd.f32 0.0, %v1815
        %v1817 = vpop.f32.mrb[0].mxu0
        %v1818 = vpop.f32.mrb[0].mxu0
        %v1819 = vpop.f32.mrb[0].mxu0
        %1820 = vdwg.mxu0
        %v1822 = vsel %vm1345, %v1768, 0
        %v1825 = vsel %vm1585, %v1772, 0
        %1827 = vmatprep.subr.bf16.mxu0 0
        %1828 = vmatpush1.bf16.msra.mxu0 %v1825
        %1829 = vmatprep.subr.bf16.mxu0 0
        %1830 = vmatpush1.bf16.msra.mxu0 0
        %1831 = vmatprep.subr.bf16.mxu0 0
        %1832 = vmatpush1.bf16.msra.mxu0 0
        %1833 = vmatprep.subr.bf16.mxu0 0
        %1834 = vmatpush1.bf16.msra.mxu0 0
        %1835 = vmatprep.subr.bf16.mxu0 0
        %1836 = vmatpush1.bf16.msra.mxu0 0
        %1837 = vmatprep.subr.bf16.mxu0 0
        %1838 = vmatpush1.bf16.msra.mxu0 0
        %1839 = vmatprep.subr.bf16.mxu0 0
        %1840 = vmatpush1.bf16.msra.mxu0 0
        %1841 = vmatprep.subr.bf16.mxu0 0
        %1842 = vmatpush1.bf16.msra.mxu0 0
        %1843 = vmatprep.subr.bf16.mxu0 0
        %1844 = vmatpush1.bf16.msra.mxu0 0
        %1845 = vmatprep.subr.bf16.mxu0 0
        %1846 = vmatpush1.bf16.msra.mxu0 0
        %1847 = vmatprep.subr.bf16.mxu0 0
        %1848 = vmatpush1.bf16.msra.mxu0 0
        %1849 = vmatprep.subr.bf16.mxu0 0
        %1850 = vmatpush1.bf16.msra.mxu0 0
        %1851 = vmatprep.subr.bf16.mxu0 0
        %1852 = vmatpush1.bf16.msra.mxu0 0
        %1853 = vmatprep.subr.bf16.mxu0 0
        %1854 = vmatpush1.bf16.msra.mxu0 0
        %1855 = vmatprep.subr.bf16.mxu0 0
        %1856 = vmatpush1.bf16.msra.mxu0 0
        %1857 = vmatprep.subr.bf16.mxu0 0
        %1858 = vmatpush1.bf16.msra.mxu0 0
        %1859 = vmatprep.mubr.bf16.mxu0 0
        %1860 = vmatmul.mubr.bf16.gmra.mrb[0].mxu0 %v1822
        %v1861 = vpop.f32.mrb[0].mxu0
        %v1862 = vadd.f32 0.0, %v1861
        %v1863 = vpop.f32.mrb[0].mxu0
        %v1864 = vpop.f32.mrb[0].mxu0
        %v1865 = vpop.f32.mrb[0].mxu0
        %1866 = vdwg.mxu0
        %v1868 = vsel %vm1345, %v1769, 0
        %v1871 = vsel %vm1585, %v1773, 0
        %1873 = vmatprep.subr.bf16.mxu0 0
        %1874 = vmatpush1.bf16.msra.mxu0 %v1871
        %1875 = vmatprep.subr.bf16.mxu0 0
        %1876 = vmatpush1.bf16.msra.mxu0 0
        %1877 = vmatprep.subr.bf16.mxu0 0
        %1878 = vmatpush1.bf16.msra.mxu0 0
        %1879 = vmatprep.subr.bf16.mxu0 0
        %1880 = vmatpush1.bf16.msra.mxu0 0
        %1881 = vmatprep.subr.bf16.mxu0 0
        %1882 = vmatpush1.bf16.msra.mxu0 0
        %1883 = vmatprep.subr.bf16.mxu0 0
        %1884 = vmatpush1.bf16.msra.mxu0 0
        %1885 = vmatprep.subr.bf16.mxu0 0
        %1886 = vmatpush1.bf16.msra.mxu0 0
        %1887 = vmatprep.subr.bf16.mxu0 0
        %1888 = vmatpush1.bf16.msra.mxu0 0
        %1889 = vmatprep.subr.bf16.mxu0 0
        %1890 = vmatpush1.bf16.msra.mxu0 0
        %1891 = vmatprep.subr.bf16.mxu0 0
        %1892 = vmatpush1.bf16.msra.mxu0 0
        %1893 = vmatprep.subr.bf16.mxu0 0
        %1894 = vmatpush1.bf16.msra.mxu0 0
        %1895 = vmatprep.subr.bf16.mxu0 0
        %1896 = vmatpush1.bf16.msra.mxu0 0
        %1897 = vmatprep.subr.bf16.mxu0 0
        %1898 = vmatpush1.bf16.msra.mxu0 0
        %1899 = vmatprep.subr.bf16.mxu0 0
        %1900 = vmatpush1.bf16.msra.mxu0 0
        %1901 = vmatprep.subr.bf16.mxu0 0
        %1902 = vmatpush1.bf16.msra.mxu0 0
        %1903 = vmatprep.subr.bf16.mxu0 0
        %1904 = vmatpush1.bf16.msra.mxu0 0
        %1905 = vmatprep.mubr.bf16.mxu0 0
        %1906 = vmatmul.mubr.bf16.gmra.mrb[0].mxu0 %v1868
        %v1907 = vpop.f32.mrb[0].mxu0
        %v1908 = vadd.f32 0.0, %v1907
        %v1909 = vpop.f32.mrb[0].mxu0
        %v1910 = vpop.f32.mrb[0].mxu0
        %v1911 = vpop.f32.mrb[0].mxu0
        %1912 = vdwg.mxu0
        %v1914 = vsel %vm1345, %v1770, 0
        %v1917 = vsel %vm1585, %v1774, 0
        %1919 = vmatprep.subr.bf16.mxu0 0
        %1920 = vmatpush1.bf16.msra.mxu0 %v1917
        %1921 = vmatprep.subr.bf16.mxu0 0
        %1922 = vmatpush1.bf16.msra.mxu0 0
        %1923 = vmatprep.subr.bf16.mxu0 0
        %1924 = vmatpush1.bf16.msra.mxu0 0
        %1925 = vmatprep.subr.bf16.mxu0 0
        %1926 = vmatpush1.bf16.msra.mxu0 0
        %1927 = vmatprep.subr.bf16.mxu0 0
        %1928 = vmatpush1.bf16.msra.mxu0 0
        %1929 = vmatprep.subr.bf16.mxu0 0
        %1930 = vmatpush1.bf16.msra.mxu0 0
        %1931 = vmatprep.subr.bf16.mxu0 0
        %1932 = vmatpush1.bf16.msra.mxu0 0
        %1933 = vmatprep.subr.bf16.mxu0 0
        %1934 = vmatpush1.bf16.msra.mxu0 0
        %1935 = vmatprep.subr.bf16.mxu0 0
        %1936 = vmatpush1.bf16.msra.mxu0 0
        %1937 = vmatprep.subr.bf16.mxu0 0
        %1938 = vmatpush1.bf16.msra.mxu0 0
        %1939 = vmatprep.subr.bf16.mxu0 0
        %1940 = vmatpush1.bf16.msra.mxu0 0
        %1941 = vmatprep.subr.bf16.mxu0 0
        %1942 = vmatpush1.bf16.msra.mxu0 0
        %1943 = vmatprep.subr.bf16.mxu0 0
        %1944 = vmatpush1.bf16.msra.mxu0 0
        %1945 = vmatprep.subr.bf16.mxu0 0
        %1946 = vmatpush1.bf16.msra.mxu0 0
        %1947 = vmatprep.subr.bf16.mxu0 0
        %1948 = vmatpush1.bf16.msra.mxu0 0
        %1949 = vmatprep.subr.bf16.mxu0 0
        %1950 = vmatpush1.bf16.msra.mxu0 0
        %1951 = vmatprep.mubr.bf16.mxu0 0
        %1952 = vmatmul.mubr.bf16.gmra.mrb[0].mxu0 %v1914
        %v1953 = vpop.f32.mrb[0].mxu0
        %v1954 = vadd.f32 0.0, %v1953
        %v1955 = vpop.f32.mrb[0].mxu0
        %v1956 = vpop.f32.mrb[0].mxu0
        %v1957 = vpop.f32.mrb[0].mxu0
        %1958 = vdwg.mxu0
        %v1959 = vld [vmem:[%s10] sm:$0x1]
        %v1961 = vlaneseq
        %v1962 = vshrl.u32 %v1961, 7
        %v1963 = vsub.s32 0, %v1962
        %v1964 = vrot.slane %v1959, %v1963
        %v1966 = vadd.f32 %v1964, %v1816
        %v1967 = vadd.f32 %v1966, %v1862
        %v1968 = vadd.f32 %v1967, %v1908
        %v1969 = vadd.f32 %v1968, %v1954
        %v1970 = vadd.f32 %v545, %v1969
        %v1971 = vld [vmem:[%s11] sm:$0x1]
        %v1972 = vld [vmem:[%s12] sm:$0x1]
        %v1973 = vsel %vm548, %v1970, 0.0
        %1974 = vadd.xlane.f32.xlu0 %v1973
        %v1975 = vpop.xlane.xlu0 %1974
        %v1976 = vmul.f32 %v1975, %v552
        %v1977 = vsub.f32 %v1970, %v1976
        %v1978 = vmul.f32 %v1977, %v1977
        %v1979 = vsel %vm548, %v1978, 0.0
        %1980 = vadd.xlane.f32.xlu0 %v1979
        %v1981 = vpop.xlane.xlu0 %1980
        %v1982 = vmul.f32 %v1981, %v552
        %v1983 = vadd.f32 %v1982, 1e-05
        %v1984 = vrsqrt.pop %v1983
        %v1985 = vmul.f32 %v1977, %v1984
        %v1987 = vlaneseq
        %v1988 = vshrl.u32 %v1987, 7
        %v1989 = vsub.s32 0, %v1988
        %v1990 = vrot.slane %v1971, %v1989
        %v1992 = vmul.f32 %v1985, %v1990
        %v1994 = vlaneseq
        %v1995 = vshrl.u32 %v1994, 7
        %v1996 = vsub.s32 0, %v1995
        %v1997 = vrot.slane %v1972, %v1996
        %v1999 = vadd.f32 %v1992, %v1997
        %v2000 = vpack.c.bf16 %v1999, %v1999
        %v2001 = vld [vmem:[%s13] sm:$0xf]
        %v2002 = vld [vmem:[%s13 + $0x4] sm:$0xf]
        %v2003 = vld [vmem:[%s13 + $0x8] sm:$0xf]
        %v2004 = vld [vmem:[%s13 + $0xc] sm:$0xf]
        %v2005 = vld [vmem:[%s14] sm:$0x1]
        %v2007 = vlaneseq
        %v2008 = vshrl.u32 %v2007, 7
        %v2009 = vsub.s32 0, %v2008
        %v2010 = vrot.slane %v2005, %v2009
        %v2016 = vunpack.c.l.b16 %v2001
        %v2017 = vunpack.c.l.b16 %v2002
        %v2018 = vunpack.c.l.b16 %v2003
        %v2019 = vunpack.c.l.b16 %v2004
        %v2020 = vpack.c.b16 %v2017, %v2016
        %v2021 = vpack.c.b16 %v2019, %v2018
        %v2025 = vsel %vm548, %v2000, 0
        %2027 = vmatprep.subr.bf16.mxu0 0
        %2028 = vmatpush1.bf16.msra.mxu0 %v2020
        %2029 = vmatprep.subr.bf16.mxu0 0
        %2030 = vmatpush1.bf16.msra.mxu0 %v2021
        %2031 = vmatprep.subr.bf16.mxu0 0
        %2032 = vmatpush1.bf16.msra.mxu0 0
        %2033 = vmatprep.subr.bf16.mxu0 0
        %2034 = vmatpush1.bf16.msra.mxu0 0
        %2035 = vmatprep.subr.bf16.mxu0 0
        %2036 = vmatpush1.bf16.msra.mxu0 0
        %2037 = vmatprep.subr.bf16.mxu0 0
        %2038 = vmatpush1.bf16.msra.mxu0 0
        %2039 = vmatprep.subr.bf16.mxu0 0
        %2040 = vmatpush1.bf16.msra.mxu0 0
        %2041 = vmatprep.subr.bf16.mxu0 0
        %2042 = vmatpush1.bf16.msra.mxu0 0
        %2043 = vmatprep.subr.bf16.mxu0 0
        %2044 = vmatpush1.bf16.msra.mxu0 0
        %2045 = vmatprep.subr.bf16.mxu0 0
        %2046 = vmatpush1.bf16.msra.mxu0 0
        %2047 = vmatprep.subr.bf16.mxu0 0
        %2048 = vmatpush1.bf16.msra.mxu0 0
        %2049 = vmatprep.subr.bf16.mxu0 0
        %2050 = vmatpush1.bf16.msra.mxu0 0
        %2051 = vmatprep.subr.bf16.mxu0 0
        %2052 = vmatpush1.bf16.msra.mxu0 0
        %2053 = vmatprep.subr.bf16.mxu0 0
        %2054 = vmatpush1.bf16.msra.mxu0 0
        %2055 = vmatprep.subr.bf16.mxu0 0
        %2056 = vmatpush1.bf16.msra.mxu0 0
        %2057 = vmatprep.subr.bf16.mxu0 0
        %2058 = vmatpush1.bf16.msra.mxu0 0
        %2059 = vmatprep.mubr.bf16.mxu0 0
        %2060 = vmatmul.mubr.bf16.gmra.mrb[0].mxu0 %v2025
        %v2061 = vpop.f32.mrb[0].mxu0
        %v2062 = vadd.f32 %v2010, %v2061
        %v2063 = vpop.f32.mrb[0].mxu0
        %v2064 = vpop.f32.mrb[0].mxu0
        %v2065 = vpop.f32.mrb[0].mxu0
        %2066 = vdwg.mxu0
        %v2067 = vmul.f32 %v2062, 0.5
        %v2068 = vmul.f32 %v2062, 0.70710677
        %v2069 = verf.f32.pop %v2068
        %v2070 = vadd.f32 %v2069, 1.0
        %v2071 = vmul.f32 %v2067, %v2070
        %v2072 = vpack.c.bf16 %v2071, %v2071
        %v2073 = vld [vmem:[%s15] sm:$0xf]
        %v2074 = vld [vmem:[%s15 + $0x4] sm:$0xf]
        %v2075 = vld [vmem:[%s15 + $0x8] sm:$0xf]
        %v2076 = vld [vmem:[%s15 + $0xc] sm:$0xf]
        %v2077 = vld [vmem:[%s15 + $0x10] sm:$0xf]
        %v2078 = vld [vmem:[%s15 + $0x14] sm:$0xf]
        %v2079 = vld [vmem:[%s15 + $0x18] sm:$0xf]
        %v2080 = vld [vmem:[%s15 + $0x1c] sm:$0xf]
        %v2081 = vld [vmem:[%s15 + $0x20] sm:$0xf]
        %v2082 = vld [vmem:[%s15 + $0x24] sm:$0xf]
        %v2083 = vld [vmem:[%s15 + $0x28] sm:$0xf]
        %v2084 = vld [vmem:[%s15 + $0x2c] sm:$0xf]
        %v2085 = vld [vmem:[%s15 + $0x30] sm:$0xf]
        %v2086 = vld [vmem:[%s15 + $0x34] sm:$0xf]
        %v2087 = vld [vmem:[%s15 + $0x38] sm:$0xf]
        %v2088 = vld [vmem:[%s15 + $0x3c] sm:$0xf]
        %v2089 = vld [vmem:[%s16] sm:$0x1]
        %v2091 = vlaneseq
        %v2092 = vshrl.u32 %v2091, 7
        %v2093 = vsub.s32 0, %v2092
        %v2094 = vrot.slane %v2089, %v2093
        %v2112 = vunpack.c.l.b16 %v2073
        %v2113 = vunpack.c.l.b16 %v2074
        %v2114 = vunpack.c.l.b16 %v2075
        %v2115 = vunpack.c.l.b16 %v2076
        %v2116 = vunpack.c.l.b16 %v2077
        %v2117 = vunpack.c.l.b16 %v2078
        %v2118 = vunpack.c.l.b16 %v2079
        %v2119 = vunpack.c.l.b16 %v2080
        %v2120 = vunpack.c.l.b16 %v2081
        %v2121 = vunpack.c.l.b16 %v2082
        %v2122 = vunpack.c.l.b16 %v2083
        %v2123 = vunpack.c.l.b16 %v2084
        %v2124 = vunpack.c.l.b16 %v2085
        %v2125 = vunpack.c.l.b16 %v2086
        %v2126 = vunpack.c.l.b16 %v2087
        %v2127 = vunpack.c.l.b16 %v2088
        %v2128 = vpack.c.b16 %v2113, %v2112
        %v2129 = vpack.c.b16 %v2115, %v2114
        %v2130 = vpack.c.b16 %v2117, %v2116
        %v2131 = vpack.c.b16 %v2119, %v2118
        %v2132 = vpack.c.b16 %v2121, %v2120
        %v2133 = vpack.c.b16 %v2123, %v2122
        %v2134 = vpack.c.b16 %v2125, %v2124
        %v2135 = vpack.c.b16 %v2127, %v2126
        %2144 = vmatprep.subr.bf16.mxu0 0
        %2145 = vmatpush1.bf16.msra.mxu0 %v2128
        %2146 = vmatprep.subr.bf16.mxu0 0
        %2147 = vmatpush1.bf16.msra.mxu0 %v2129
        %2148 = vmatprep.subr.bf16.mxu0 0
        %2149 = vmatpush1.bf16.msra.mxu0 %v2130
        %2150 = vmatprep.subr.bf16.mxu0 0
        %2151 = vmatpush1.bf16.msra.mxu0 %v2131
        %2152 = vmatprep.subr.bf16.mxu0 0
        %2153 = vmatpush1.bf16.msra.mxu0 %v2132
        %2154 = vmatprep.subr.bf16.mxu0 0
        %2155 = vmatpush1.bf16.msra.mxu0 %v2133
        %2156 = vmatprep.subr.bf16.mxu0 0
        %2157 = vmatpush1.bf16.msra.mxu0 %v2134
        %2158 = vmatprep.subr.bf16.mxu0 0
        %2159 = vmatpush1.bf16.msra.mxu0 %v2135
        %2160 = vmatprep.subr.bf16.mxu0 0
        %2161 = vmatpush1.bf16.msra.mxu0 0
        %2162 = vmatprep.subr.bf16.mxu0 0
        %2163 = vmatpush1.bf16.msra.mxu0 0
        %2164 = vmatprep.subr.bf16.mxu0 0
        %2165 = vmatpush1.bf16.msra.mxu0 0
        %2166 = vmatprep.subr.bf16.mxu0 0
        %2167 = vmatpush1.bf16.msra.mxu0 0
        %2168 = vmatprep.subr.bf16.mxu0 0
        %2169 = vmatpush1.bf16.msra.mxu0 0
        %2170 = vmatprep.subr.bf16.mxu0 0
        %2171 = vmatpush1.bf16.msra.mxu0 0
        %2172 = vmatprep.subr.bf16.mxu0 0
        %2173 = vmatpush1.bf16.msra.mxu0 0
        %2174 = vmatprep.subr.bf16.mxu0 0
        %2175 = vmatpush1.bf16.msra.mxu0 0
        %2176 = vmatprep.mubr.bf16.mxu0 0
        %2177 = vmatmul.mubr.bf16.gmra.mrb[0].mxu0 %v2072
        %v2178 = vpop.f32.mrb[0].mxu0
        %v2179 = vadd.f32 %v2094, %v2178
        %v2180 = vpop.f32.mrb[0].mxu0
        %v2181 = vpop.f32.mrb[0].mxu0
        %v2182 = vpop.f32.mrb[0].mxu0
        %2183 = vdwg.mxu0
        %v2184 = vadd.f32 %v1970, %v2179
        %2185 = vst.msk [vmem:[%s539] sm:$0xff] %vm548, %v2184
        %s2186 = sand.u32 %s401, 1
        %s2187 = scalar_lea.sflag [#allocation3], %s2186
        %s2188 = sand.u32 %s401, 1
        %s2189 = smul.addr %s2188, 8
        %s2190 = scalar_lea.vmem [#allocation2], %s2189
        // Predicated region
        $region89: #{block_forward.1} parent=87 // pred_check
          %p2191 = pneg %p411
        $region90: #{block_forward.1} parent=87 // pred_check_branch
          %2193 = sbr.rel (%p2191) target = $region92
        $region91: #{block_forward.1} parent=87 // pred_region
          %s2195 = ssub.s32 128, 128
          %2196 = vsyncadd %s2187, %s2195
          %s2197 = smul.addr %s31, 128
          %s2198 = scalar_lea.hbm %s17, %s2197
          %s2200 = sshll.u32 %s2190, 4
          %s2201 = int_to_ptr.vmem [resolvable:$true] %s2200
          %2203 = dma.vmem_to_hbm [thread:$0]  %s2201, 128, %s2198, %s2187
        $region92: #{block_forward.1} parent=87 // pred_fallthru
          _
      $region88: #{block_forward.1} parent=5 // pred_fallthru
        _
      %p2204 = scmp.le.s32.totalorder 2, %s26
      // Predicated region
      $region93: #{block_forward.1} parent=5 // pred_check
        %p2205 = pneg %p2204
      $region94: #{block_forward.1} parent=5 // pred_check_branch
        %2207 = sbr.rel (%p2205) target = $region96
      $region95: #{block_forward.1} parent=5 // pred_region
        %s2208 = ssub.s32 %s26, 2
        // Predicated region
        $region97: #{block_forward.1} parent=95 // pred_check
          %p2209 = pneg %p417
        $region98: #{block_forward.1} parent=95 // pred_check_branch
          %2211 = sbr.rel (%p2209) target = $region100
        $region99: #{block_forward.1} parent=95 // pred_region
          %s2212 = sand.u32 %s402, 1
          %s2213 = scalar_lea.sflag [#allocation3], %s2212
          %s2214 = sand.u32 %s402, 1
          %s2215 = smul.addr %s2214, 8
          %s2216 = scalar_lea.vmem [#allocation2], %s2215
          %2217 = dma.done %s2213, 128
        $region100: #{block_forward.1} parent=95 // pred_fallthru
          _
      $region96: #{block_forward.1} parent=5 // pred_fallthru
        _
    $region6: #{block_forward.1} parent=1 // loop_footer
      %s30 = sadd.s32 1, %s26
    $region7: #{block_forward.1} parent=1 // loop_footer_branch
      %25 = sbr.rel target = $region3
    $region8: #{block_forward.1} parent=1 // loop_exit
      _
    %2218 = vsyncpa [#allocation3], 1
    %s2219 = scalar_lea.sflag [#allocation3], 1
    %2220 = vsyncpa %s2219, 1

</llo_original>
